<compile_context>
chip_gen: v7x
topology: tpu7x:2x2x1
jax: 0.10.0
libtpu: 0.0.40
codegen_flags: <defaults>
</compile_context>

<pallas_src>
import functools

import jax
import jax.numpy as jnp
from jax import lax
from jax.experimental import pallas as pl
from jax.experimental.pallas import tpu as pltpu


def _round_up(x, m):
    return (x + m - 1) // m * m


def _tag_max(x, num_tags, unrolled):
    """Max over the tag (sublane) axis of a (T, B) tile -> (1, B)."""
    if unrolled:
        m = x[0:1, :]
        for j in range(1, num_tags):
            m = jnp.maximum(m, x[j:j + 1, :])
        return m
    return jnp.max(x, axis=0, keepdims=True)


def _tag_sum(x, num_tags, unrolled):
    """Sum over the tag (sublane) axis of a (T, B) tile -> (1, B)."""
    if unrolled:
        acc = x[0:1, :]
        for j in range(1, num_tags):
            acc = acc + x[j:j + 1, :]
        return acc
    return jnp.sum(x, axis=0, keepdims=True)


def _crf_norm_kernel(maxlen_ref, em_ref, len_ref, start_ref, exp_end_ref,
                     exp_transt_ref, denom_ref, p_ref, l_ref, *,
                     s_chunk, unroll, small_tags):
    """Forward-algorithm normalizer, carried in scaled exp-space, batch on lanes.

    Grid: (num_b_tiles, num_s_chunks); the S axis is the inner ("arbitrary") axis.

    Kernel state (VMEM scratch, persists across the S chunks of one batch tile):
      p_ref (T, B_TILE): exp(alpha - L - c*gmax), rescaled so max over tags == 1
      l_ref (1, B_TILE): running log-scale L
    where alpha is the torchcrf forward variable, c the number of applied transition
    steps and gmax = max(transitions) was folded out of exp_transt in the wrapper.
    The wrapper adds (length - 1) * gmax + max(end) back onto the kernel output.

    maxlen_ref:    (nb,)              i32  scalar prefetch: max seq length per batch tile
    em_ref:        (S_CHUNK, T, B)         emissions chunk, time-major, batch on lanes
    len_ref:       (1, B)             f32  per-sequence lengths
    start_ref:     (T, 1)             f32  start transitions
    exp_end_ref:   (T, 1)             f32  exp(end - max(end))
    exp_transt_ref:(T, T)             f32  exp(transitions.T - max(transitions))  [cur, prev]
    denom_ref:     (1, B)             f32  output (before wrapper corrections)
    """
    b = pl.program_id(0)
    s = pl.program_id(1)
    num_tags = exp_transt_ref.shape[0]

    # Initialize state on the first S chunk: alpha_0 = start + emissions[0].
    @pl.when(s == 0)
    def _init():
        a0 = start_ref[...] + em_ref[0].astype(jnp.float32)          # (T, B)
        m0 = _tag_max(a0, num_tags, small_tags)                       # (1, B)
        p_ref[...] = jnp.exp(a0 - m0)
        l_ref[...] = m0

    base = s * s_chunk

    # Skip chunks that lie entirely past every sequence in this batch tile.
    @pl.when(base < maxlen_ref[b])
    def _recurrence():
        lengths = len_ref[...]                                        # (1, B)
        exp_transt = exp_transt_ref[...]                              # (T, T)
        if small_tags:
            # Loop-invariant (T, 1) columns, hoisted out of the time loop.
            cols = [exp_transt[:, j:j + 1] for j in range(num_tags)]

        def body(t, carry):
            p, lacc = carry
            em_t = em_ref[t].astype(jnp.float32)                      # (T, B)
            emmax = _tag_max(em_t, num_tags, small_tags)               # off serial chain
            e = jnp.exp(em_t - emmax)                                  # off serial chain
            if small_tags:
                # VPU contraction over previous tags: q[cur] = sum_prev A[cur,prev] p[prev]
                q = cols[0] * p[0:1, :]
                for j in range(1, num_tags):
                    q = q + cols[j] * p[j:j + 1, :]
            else:
                q = jnp.dot(exp_transt, p, preferred_element_type=jnp.float32)
            q = q * e                                                  # (T, B)
            m = _tag_max(q, num_tags, small_tags)                      # (1, B)
            p_new = q / m
            l_new = lacc + emmax + jnp.log(m)                          # off p-chain
            g = (base + t).astype(jnp.float32)                         # global step index
            # Step 0 was handled by the init; masked steps keep the state unchanged.
            do = jnp.logical_and(g >= 1.0, lengths > g)                # (1, B)
            return jnp.where(do, p_new, p), jnp.where(do, l_new, lacc)

        p, lacc = lax.fori_loop(0, s_chunk, body, (p_ref[...], l_ref[...]),
                                unroll=unroll)
        p_ref[...] = p
        l_ref[...] = lacc

    # Finalize only once, on the last S chunk.
    @pl.when(s == pl.num_programs(1) - 1)
    def _finalize():
        z = _tag_sum(p_ref[...] * exp_end_ref[...], num_tags, small_tags)  # (1, B)
        denom_ref[...] = l_ref[...] + jnp.log(z)


def crf_forward(emissions, tags, mask, start_transitions, end_transitions,
                transitions, reduction="mean",
                emissions_stream_dtype=jnp.float32):
    """batch_first=True CRF forward: returns (denominator - numerator), reduced.

    Assumes torchcrf's usual preconditions: mask[:, 0] is all on and the mask is a
    contiguous prefix per sequence (the PyTorch module's own numerator relies on this
    through seq_ends = mask.sum() - 1; an all-zero mask row is out of spec).
    """
    B, S, T = emissions.shape
    em = emissions.astype(jnp.float32)
    tg = tags.astype(jnp.int32)
    mk = mask.astype(jnp.float32)

    start_f = start_transitions.astype(jnp.float32)
    end_f = end_transitions.astype(jnp.float32)
    trans_f = transitions.astype(jnp.float32)

    # ---------------- numerator (gold-path score): fully vectorized, no recurrence ------
    em_tag = jnp.take_along_axis(em, tg[..., None], axis=-1)[..., 0]       # (B, S)
    trans_sc = trans_f[tg[:, :-1], tg[:, 1:]]                              # (B, S-1)
    numerator = start_f[tg[:, 0]] + em_tag[:, 0]
    numerator = numerator + jnp.sum((trans_sc + em_tag[:, 1:]) * mk[:, 1:], axis=1)
    seq_ends = jnp.sum(mk, axis=1).astype(jnp.int32) - 1                   # (B,)
    last_tags = jnp.take_along_axis(tg, seq_ends[:, None], axis=1)[:, 0]   # (B,)
    numerator = numerator + end_f[last_tags]

    # ---------------- denominator (forward algorithm) in the Pallas kernel --------------
    B_TILE = 128                                    # lane width; batches > 128 split across TCs
    B_pad = _round_up(B, B_TILE)
    stream_bytes = jnp.dtype(emissions_stream_dtype).itemsize
    # VMEM-budgeted chunk length (double-buffered emissions block <= ~4 MiB).
    bytes_per_step = T * B_TILE * stream_bytes * 2
    S_CHUNK = int(min(S, 256, max(8, (4 << 20) // bytes_per_step)))
    S_pad = _round_up(S, S_CHUNK)
    UNROLL = int(min(8, S_CHUNK))

    # One transpose pass, directly into the lane-dense streaming layout (S, T, B_pad).
    em_stb = jnp.transpose(em, (1, 2, 0)).astype(emissions_stream_dtype)
    em_stb = jnp.pad(em_stb, ((0, S_pad - S), (0, 0), (0, B_pad - B)))

    lengths = jnp.sum(mk, axis=1)                                          # (B,) f32
    lengths_pad = jnp.pad(lengths, (0, B_pad - B))                         # padded rows -> 0
    len_row = lengths_pad.reshape(1, B_pad).astype(jnp.float32)

    nb = B_pad // B_TILE
    ns = S_pad // S_CHUNK
    # Scalar-prefetched per-tile max length: lets the kernel skip fully-masked chunks.
    tile_max_len = jnp.max(lengths_pad.reshape(nb, B_TILE), axis=1).astype(jnp.int32)

    gmax = jnp.max(trans_f)                                                # scalar shift
    endmax = jnp.max(end_f)                                                # scalar shift
    exp_transt = jnp.exp(trans_f.T - gmax)                                 # (T, T) [cur, prev]
    start2 = start_f.reshape(T, 1)
    exp_end2 = jnp.exp(end_f - endmax).reshape(T, 1)

    small_tags = T <= 16
    kernel = functools.partial(_crf_norm_kernel, s_chunk=S_CHUNK, unroll=UNROLL,
                               small_tags=small_tags)

    denom_raw = pl.pallas_call(
        kernel,
        out_shape=jax.ShapeDtypeStruct((1, B_pad), jnp.float32),
        grid_spec=pltpu.PrefetchScalarGridSpec(
            num_scalar_prefetch=1,
            grid=(nb, ns),
            in_specs=[
                pl.BlockSpec((S_CHUNK, T, B_TILE), lambda b, s, ml: (s, 0, b)),  # emissions
                pl.BlockSpec((1, B_TILE), lambda b, s, ml: (0, b)),              # lengths
                pl.BlockSpec((T, 1), lambda b, s, ml: (0, 0)),                   # start
                pl.BlockSpec((T, 1), lambda b, s, ml: (0, 0)),                   # exp(end)
                pl.BlockSpec((T, T), lambda b, s, ml: (0, 0)),                   # exp(trans.T)
            ],
            out_specs=pl.BlockSpec((1, B_TILE), lambda b, s, ml: (0, b)),
            scratch_shapes=[pltpu.VMEM((T, B_TILE), jnp.float32),    # p (scaled exp alpha)
                            pltpu.VMEM((1, B_TILE), jnp.float32)],   # L (log scale)
        ),
        compiler_params=pltpu.CompilerParams(
            dimension_semantics=("parallel", "arbitrary")),
        cost_estimate=pl.CostEstimate(
            flops=int(2 * S_pad * B_pad * T * T + 8 * S_pad * B_pad * T),
            transcendentals=int(S_pad * B_pad * (T + 2)),
            bytes_accessed=int(S_pad * B_pad * T * stream_bytes + 8 * B_pad * 4)),
    )(tile_max_len, em_stb, len_row, start2, exp_end2, exp_transt)

    # Undo the global shifts folded out of the kernel: gmax per applied transition step,
    # endmax once.
    denom = denom_raw[0, :B] + (lengths - 1.0) * gmax + endmax
    llh = denom - numerator

    if reduction == "none":
        return llh
    if reduction == "sum":
        return jnp.sum(llh)
    if reduction == "mean":
        return jnp.mean(llh)
    assert reduction == "token_mean"
    return jnp.sum(llh) / jnp.sum(mk)


def crf_forward_ref(emissions, tags, mask, start, end, trans, reduction="mean"):
    """Pure-JAX reference mirroring the PyTorch module exactly."""
    em = jnp.transpose(emissions, (1, 0, 2)).astype(jnp.float32)
    tg = jnp.transpose(tags, (1, 0)).astype(jnp.int32)
    mk = jnp.transpose(mask, (1, 0)).astype(jnp.float32)
    S, B, T = em.shape

    score = start[tg[0]] + em[0, jnp.arange(B), tg[0]]
    for i in range(1, S):
        score = score + trans[tg[i - 1], tg[i]] * mk[i]
        score = score + em[i, jnp.arange(B), tg[i]] * mk[i]
    seq_ends = jnp.sum(mk, axis=0).astype(jnp.int32) - 1
    last_tags = tg[seq_ends, jnp.arange(B)]
    score = score + end[last_tags]

    alpha = start + em[0]
    for i in range(1, S):
        nxt = jax.nn.logsumexp(alpha[:, :, None] + trans[None] + em[i][:, None, :],
                               axis=1)
        alpha = jnp.where(mk[i][:, None] > 0, nxt, alpha)
    denom = jax.nn.logsumexp(alpha + end, axis=1)

    llh = denom - score
    if reduction == "none":
        return llh
    if reduction == "sum":
        return jnp.sum(llh)
    if reduction == "mean":
        return jnp.mean(llh)
    return jnp.sum(llh) / jnp.sum(mk)


if __name__ == "__main__":
    num_tags = 4
    batch, seq = 2, 8

    key = jax.random.PRNGKey(0)
    k_em, k_tags, k_st, k_en, k_tr = jax.random.split(key, 5)

    # Deterministic "parameters" — uniform(-0.1, 0.1) like reset_parameters()
    init_range = 0.1
    start_transitions = jax.random.uniform(k_st, (num_tags,),
                                           minval=-init_range, maxval=init_range)
    end_transitions = jax.random.uniform(k_en, (num_tags,),
                                         minval=-init_range, maxval=init_range)
    transitions = jax.random.uniform(k_tr, (num_tags, num_tags),
                                     minval=-init_range, maxval=init_range)

    # Inputs (batch_first): emissions (B, S, T), tags (B, S), mask (B, S)
    emissions = jax.random.normal(k_em, (batch, seq, num_tags), dtype=jnp.float32)
    tags = jax.random.randint(k_tags, (batch, seq), 0, num_tags, dtype=jnp.int32)
    lengths = jnp.array([seq, 5], dtype=jnp.int32)      # first timestep all on
    mask = (jnp.arange(seq)[None, :] < lengths[:, None]).astype(jnp.float32)

    crf_fn = jax.jit(crf_forward, static_argnames=("reduction",
                                                   "emissions_stream_dtype"))

    out_mean = crf_fn(emissions, tags, mask, start_transitions,
                      end_transitions, transitions, reduction="mean")
    out_mean = jax.block_until_ready(out_mean)
    out_none = crf_fn(emissions, tags, mask, start_transitions,
                      end_transitions, transitions, reduction="none")
    out_none = jax.block_until_ready(out_none)

    ref_mean = crf_forward_ref(emissions, tags, mask, start_transitions,
                               end_transitions, transitions, reduction="mean")
    ref_none = crf_forward_ref(emissions, tags, mask, start_transitions,
                               end_transitions, transitions, reduction="none")
    jax.block_until_ready(ref_mean)

    assert jnp.allclose(out_mean, ref_mean, atol=1e-4, rtol=1e-4), (out_mean, ref_mean)
    assert jnp.allclose(out_none, ref_none, atol=1e-4, rtol=1e-4), (out_none, ref_none)
    print("KERNEL_OK")
</pallas_src>

<mosaic_0001>
module attributes {stable_mosaic.version = 11 : i64} {
  func.func @_crf_norm_kernel(%arg0: i32, %arg1: i32, %arg2: memref<1xi32, #tpu.memory_space<smem>>, %arg3: memref<8x4x128xf32, #tpu.memory_space<vmem>>, %arg4: memref<1x128xf32, #tpu.memory_space<vmem>>, %arg5: memref<4x1xf32, #tpu.memory_space<vmem>>, %arg6: memref<4x1xf32, #tpu.memory_space<vmem>>, %arg7: memref<4x4xf32, #tpu.memory_space<vmem>>, %arg8: memref<1x128xf32, #tpu.memory_space<vmem>>, %arg9: memref<4x128xf32, #tpu.memory_space<vmem>>, %arg10: memref<1x128xf32, #tpu.memory_space<vmem>>) attributes {dimension_semantics = [#tpu.dimension_semantics<parallel>, #tpu.dimension_semantics<arbitrary>], iteration_bounds = array<i64: 1, 1>, scalar_prefetch = 1 : i64, scratch_operands = 2 : i64, tpu.core_type = #tpu.core_type<tc>, window_params = [{transform_indices = @transform_0, window_bounds = array<i64: 8, 4, 128>}, {transform_indices = @transform_1, window_bounds = array<i64: 1, 128>}, {pipeline_mode = #tpu.pipeline_mode<synchronous>, transform_indices = @transform_2, window_bounds = array<i64: 4, 1>}, {pipeline_mode = #tpu.pipeline_mode<synchronous>, transform_indices = @transform_3, window_bounds = array<i64: 4, 1>}, {pipeline_mode = #tpu.pipeline_mode<synchronous>, transform_indices = @transform_4, window_bounds = array<i64: 4, 4>}, {transform_indices = @transform_5, window_bounds = array<i64: 1, 128>}]} {
    %c0_i32 = arith.constant 0 : i32
    %0 = arith.cmpi eq, %arg1, %c0_i32 : i32
    %1 = arith.extui %0 : i1 to i32
    %c0_i32_0 = arith.constant 0 : i32
    %2 = arith.cmpi ne, %1, %c0_i32_0 : i32
    scf.if %2 {
      %c0 = arith.constant 0 : index
      %c0_4 = arith.constant 0 : index
      %12 = vector.load %arg5[%c0, %c0_4] : memref<4x1xf32, #tpu.memory_space<vmem>>, vector<4x1xf32>
      %c0_5 = arith.constant 0 : index
      %c0_6 = arith.constant 0 : index
      %c0_7 = arith.constant 0 : index
      %13 = vector.load %arg3[%c0_5, %c0_6, %c0_7] : memref<8x4x128xf32, #tpu.memory_space<vmem>>, vector<1x4x128xf32>
      %14 = vector.shape_cast %13 : vector<1x4x128xf32> to vector<4x128xf32>
      %15 = vector.broadcast %12 : vector<4x1xf32> to vector<4x128xf32>
      %16 = arith.addf %15, %14 : vector<4x128xf32>
      %17 = vector.extract_strided_slice %16 {offsets = [0, 0], sizes = [1, 128], strides = [1, 1]} : vector<4x128xf32> to vector<1x128xf32>
      %18 = vector.extract_strided_slice %16 {offsets = [1, 0], sizes = [1, 128], strides = [1, 1]} : vector<4x128xf32> to vector<1x128xf32>
      %19 = arith.maximumf %17, %18 : vector<1x128xf32>
      %20 = vector.extract_strided_slice %16 {offsets = [2, 0], sizes = [1, 128], strides = [1, 1]} : vector<4x128xf32> to vector<1x128xf32>
      %21 = arith.maximumf %19, %20 : vector<1x128xf32>
      %22 = vector.extract_strided_slice %16 {offsets = [3, 0], sizes = [1, 128], strides = [1, 1]} : vector<4x128xf32> to vector<1x128xf32>
      %23 = arith.maximumf %21, %22 : vector<1x128xf32>
      %24 = vector.broadcast %23 : vector<1x128xf32> to vector<4x128xf32>
      %25 = arith.subf %16, %24 : vector<4x128xf32>
      %26 = math.exp %25 : vector<4x128xf32>
      %c0_8 = arith.constant 0 : index
      %c0_9 = arith.constant 0 : index
      %27 = vector.load %arg9[%c0_8, %c0_9] : memref<4x128xf32, #tpu.memory_space<vmem>>, vector<4x128xf32>
      tpu.vector_store %arg9[%c0_8, %c0_9], %26 {strides = array<i32>} : memref<4x128xf32, #tpu.memory_space<vmem>>, vector<4x128xf32>,
      %c0_10 = arith.constant 0 : index
      %c0_11 = arith.constant 0 : index
      %28 = vector.load %arg10[%c0_10, %c0_11] : memref<1x128xf32, #tpu.memory_space<vmem>>, vector<1x128xf32>
      tpu.vector_store %arg10[%c0_10, %c0_11], %23 {strides = array<i32>} : memref<1x128xf32, #tpu.memory_space<vmem>>, vector<1x128xf32>,
    } else {
    }
    %c8_i32 = arith.constant 8 : i32
    %3 = arith.muli %arg1, %c8_i32 : i32
    %4 = arith.index_cast %arg0 : i32 to index
    %5 = memref.load %arg2[%4] : memref<1xi32, #tpu.memory_space<smem>>
    %6 = arith.cmpi slt, %3, %5 : i32
    %7 = arith.extui %6 : i1 to i32
    %c0_i32_1 = arith.constant 0 : i32
    %8 = arith.cmpi ne, %7, %c0_i32_1 : i32
    scf.if %8 {
      %c0 = arith.constant 0 : index
      %c0_4 = arith.constant 0 : index
      %12 = vector.load %arg4[%c0, %c0_4] : memref<1x128xf32, #tpu.memory_space<vmem>>, vector<1x128xf32>
      %c0_5 = arith.constant 0 : index
      %c0_6 = arith.constant 0 : index
      %13 = vector.load %arg7[%c0_5, %c0_6] : memref<4x4xf32, #tpu.memory_space<vmem>>, vector<4x4xf32>
      %14 = vector.extract_strided_slice %13 {offsets = [0, 0], sizes = [4, 1], strides = [1, 1]} : vector<4x4xf32> to vector<4x1xf32>
      %15 = vector.extract_strided_slice %13 {offsets = [0, 1], sizes = [4, 1], strides = [1, 1]} : vector<4x4xf32> to vector<4x1xf32>
      %16 = vector.extract_strided_slice %13 {offsets = [0, 2], sizes = [4, 1], strides = [1, 1]} : vector<4x4xf32> to vector<4x1xf32>
      %17 = vector.extract_strided_slice %13 {offsets = [0, 3], sizes = [4, 1], strides = [1, 1]} : vector<4x4xf32> to vector<4x1xf32>
      %c0_7 = arith.constant 0 : index
      %c0_8 = arith.constant 0 : index
      %18 = vector.load %arg9[%c0_7, %c0_8] : memref<4x128xf32, #tpu.memory_space<vmem>>, vector<4x128xf32>
      %c0_9 = arith.constant 0 : index
      %c0_10 = arith.constant 0 : index
      %19 = vector.load %arg10[%c0_9, %c0_10] : memref<1x128xf32, #tpu.memory_space<vmem>>, vector<1x128xf32>
      %c0_i32_11 = arith.constant 0 : i32
      %20 = arith.index_cast %c0_i32_11 : i32 to index
      %c0_12 = arith.constant 0 : index
      %c0_13 = arith.constant 0 : index
      %21 = vector.load %arg3[%20, %c0_12, %c0_13] : memref<8x4x128xf32, #tpu.memory_space<vmem>>, vector<1x4x128xf32>
      %22 = vector.shape_cast %21 : vector<1x4x128xf32> to vector<4x128xf32>
      %23 = vector.extract_strided_slice %22 {offsets = [0, 0], sizes = [1, 128], strides = [1, 1]} : vector<4x128xf32> to vector<1x128xf32>
      %24 = vector.extract_strided_slice %22 {offsets = [1, 0], sizes = [1, 128], strides = [1, 1]} : vector<4x128xf32> to vector<1x128xf32>
      %25 = arith.maximumf %23, %24 : vector<1x128xf32>
      %26 = vector.extract_strided_slice %22 {offsets = [2, 0], sizes = [1, 128], strides = [1, 1]} : vector<4x128xf32> to vector<1x128xf32>
      %27 = arith.maximumf %25, %26 : vector<1x128xf32>
      %28 = vector.extract_strided_slice %22 {offsets = [3, 0], sizes = [1, 128], strides = [1, 1]} : vector<4x128xf32> to vector<1x128xf32>
      %29 = arith.maximumf %27, %28 : vector<1x128xf32>
      %30 = vector.broadcast %29 : vector<1x128xf32> to vector<4x128xf32>
      %31 = arith.subf %22, %30 : vector<4x128xf32>
      %32 = math.exp %31 : vector<4x128xf32>
      %33 = vector.extract_strided_slice %18 {offsets = [0, 0], sizes = [1, 128], strides = [1, 1]} : vector<4x128xf32> to vector<1x128xf32>
      %34 = vector.broadcast %14 : vector<4x1xf32> to vector<4x128xf32>
      %35 = vector.broadcast %33 : vector<1x128xf32> to vector<4x128xf32>
      %36 = arith.mulf %34, %35 : vector<4x128xf32>
      %37 = vector.extract_strided_slice %18 {offsets = [1, 0], sizes = [1, 128], strides = [1, 1]} : vector<4x128xf32> to vector<1x128xf32>
      %38 = vector.broadcast %15 : vector<4x1xf32> to vector<4x128xf32>
      %39 = vector.broadcast %37 : vector<1x128xf32> to vector<4x128xf32>
      %40 = arith.mulf %38, %39 : vector<4x128xf32>
      %41 = arith.addf %36, %40 : vector<4x128xf32>
      %42 = vector.extract_strided_slice %18 {offsets = [2, 0], sizes = [1, 128], strides = [1, 1]} : vector<4x128xf32> to vector<1x128xf32>
      %43 = vector.broadcast %16 : vector<4x1xf32> to vector<4x128xf32>
      %44 = vector.broadcast %42 : vector<1x128xf32> to vector<4x128xf32>
      %45 = arith.mulf %43, %44 : vector<4x128xf32>
      %46 = arith.addf %41, %45 : vector<4x128xf32>
      %47 = vector.extract_strided_slice %18 {offsets = [3, 0], sizes = [1, 128], strides = [1, 1]} : vector<4x128xf32> to vector<1x128xf32>
      %48 = vector.broadcast %17 : vector<4x1xf32> to vector<4x128xf32>
      %49 = vector.broadcast %47 : vector<1x128xf32> to vector<4x128xf32>
      %50 = arith.mulf %48, %49 : vector<4x128xf32>
      %51 = arith.addf %46, %50 : vector<4x128xf32>
      %52 = arith.mulf %51, %32 : vector<4x128xf32>
      %53 = vector.extract_strided_slice %52 {offsets = [0, 0], sizes = [1, 128], strides = [1, 1]} : vector<4x128xf32> to vector<1x128xf32>
      %54 = vector.extract_strided_slice %52 {offsets = [1, 0], sizes = [1, 128], strides = [1, 1]} : vector<4x128xf32> to vector<1x128xf32>
      %55 = arith.maximumf %53, %54 : vector<1x128xf32>
      %56 = vector.extract_strided_slice %52 {offsets = [2, 0], sizes = [1, 128], strides = [1, 1]} : vector<4x128xf32> to vector<1x128xf32>
      %57 = arith.maximumf %55, %56 : vector<1x128xf32>
      %58 = vector.extract_strided_slice %52 {offsets = [3, 0], sizes = [1, 128], strides = [1, 1]} : vector<4x128xf32> to vector<1x128xf32>
      %59 = arith.maximumf %57, %58 : vector<1x128xf32>
      %60 = vector.broadcast %59 : vector<1x128xf32> to vector<4x128xf32>
      %61 = arith.divf %52, %60 : vector<4x128xf32>
      %62 = arith.addf %19, %29 : vector<1x128xf32>
      %63 = math.log %59 : vector<1x128xf32>
      %64 = arith.addf %62, %63 : vector<1x128xf32>
      %65 = arith.addi %3, %c0_i32_11 : i32
      %66 = arith.sitofp %65 : i32 to f32
      %cst = arith.constant 1.000000e+00 : f32
      %67 = arith.cmpf oge, %66, %cst : f32
      %68 = vector.broadcast %66 : f32 to vector<1x128xf32>
      %69 = arith.cmpf ogt, %12, %68 : vector<1x128xf32>
      %70 = vector.broadcast %67 : i1 to vector<1x128xi1>
      %71 = arith.andi %70, %69 : vector<1x128xi1>
      %72 = vector.shape_cast %71 : vector<1x128xi1> to vector<1x128xi1>
      %73 = vector.broadcast %72 : vector<1x128xi1> to vector<4x128xi1>
      %74 = arith.select %73, %61, %18 : vector<4x128xi1>, vector<4x128xf32>
      %75 = arith.select %71, %64, %19 : vector<1x128xi1>, vector<1x128xf32>
      %c1_i32 = arith.constant 1 : i32
      %76 = arith.index_cast %c1_i32 : i32 to index
      %c0_14 = arith.constant 0 : index
      %c0_15 = arith.constant 0 : index
      %77 = vector.load %arg3[%76, %c0_14, %c0_15] : memref<8x4x128xf32, #tpu.memory_space<vmem>>, vector<1x4x128xf32>
      %78 = vector.shape_cast %77 : vector<1x4x128xf32> to vector<4x128xf32>
      %79 = vector.extract_strided_slice %78 {offsets = [0, 0], sizes = [1, 128], strides = [1, 1]} : vector<4x128xf32> to vector<1x128xf32>
      %80 = vector.extract_strided_slice %78 {offsets = [1, 0], sizes = [1, 128], strides = [1, 1]} : vector<4x128xf32> to vector<1x128xf32>
      %81 = arith.maximumf %79, %80 : vector<1x128xf32>
      %82 = vector.extract_strided_slice %78 {offsets = [2, 0], sizes = [1, 128], strides = [1, 1]} : vector<4x128xf32> to vector<1x128xf32>
      %83 = arith.maximumf %81, %82 : vector<1x128xf32>
      %84 = vector.extract_strided_slice %78 {offsets = [3, 0], sizes = [1, 128], strides = [1, 1]} : vector<4x128xf32> to vector<1x128xf32>
      %85 = arith.maximumf %83, %84 : vector<1x128xf32>
      %86 = vector.broadcast %85 : vector<1x128xf32> to vector<4x128xf32>
      %87 = arith.subf %78, %86 : vector<4x128xf32>
      %88 = math.exp %87 : vector<4x128xf32>
      %89 = vector.extract_strided_slice %74 {offsets = [0, 0], sizes = [1, 128], strides = [1, 1]} : vector<4x128xf32> to vector<1x128xf32>
      %90 = vector.broadcast %14 : vector<4x1xf32> to vector<4x128xf32>
      %91 = vector.broadcast %89 : vector<1x128xf32> to vector<4x128xf32>
      %92 = arith.mulf %90, %91 : vector<4x128xf32>
      %93 = vector.extract_strided_slice %74 {offsets = [1, 0], sizes = [1, 128], strides = [1, 1]} : vector<4x128xf32> to vector<1x128xf32>
      %94 = vector.broadcast %15 : vector<4x1xf32> to vector<4x128xf32>
      %95 = vector.broadcast %93 : vector<1x128xf32> to vector<4x128xf32>
      %96 = arith.mulf %94, %95 : vector<4x128xf32>
      %97 = arith.addf %92, %96 : vector<4x128xf32>
      %98 = vector.extract_strided_slice %74 {offsets = [2, 0], sizes = [1, 128], strides = [1, 1]} : vector<4x128xf32> to vector<1x128xf32>
      %99 = vector.broadcast %16 : vector<4x1xf32> to vector<4x128xf32>
      %100 = vector.broadcast %98 : vector<1x128xf32> to vector<4x128xf32>
      %101 = arith.mulf %99, %100 : vector<4x128xf32>
      %102 = arith.addf %97, %101 : vector<4x128xf32>
      %103 = vector.extract_strided_slice %74 {offsets = [3, 0], sizes = [1, 128], strides = [1, 1]} : vector<4x128xf32> to vector<1x128xf32>
      %104 = vector.broadcast %17 : vector<4x1xf32> to vector<4x128xf32>
      %105 = vector.broadcast %103 : vector<1x128xf32> to vector<4x128xf32>
      %106 = arith.mulf %104, %105 : vector<4x128xf32>
      %107 = arith.addf %102, %106 : vector<4x128xf32>
      %108 = arith.mulf %107, %88 : vector<4x128xf32>
      %109 = vector.extract_strided_slice %108 {offsets = [0, 0], sizes = [1, 128], strides = [1, 1]} : vector<4x128xf32> to vector<1x128xf32>
      %110 = vector.extract_strided_slice %108 {offsets = [1, 0], sizes = [1, 128], strides = [1, 1]} : vector<4x128xf32> to vector<1x128xf32>
      %111 = arith.maximumf %109, %110 : vector<1x128xf32>
      %112 = vector.extract_strided_slice %108 {offsets = [2, 0], sizes = [1, 128], strides = [1, 1]} : vector<4x128xf32> to vector<1x128xf32>
      %113 = arith.maximumf %111, %112 : vector<1x128xf32>
      %114 = vector.extract_strided_slice %108 {offsets = [3, 0], sizes = [1, 128], strides = [1, 1]} : vector<4x128xf32> to vector<1x128xf32>
      %115 = arith.maximumf %113, %114 : vector<1x128xf32>
      %116 = vector.broadcast %115 : vector<1x128xf32> to vector<4x128xf32>
      %117 = arith.divf %108, %116 : vector<4x128xf32>
      %118 = arith.addf %75, %85 : vector<1x128xf32>
      %119 = math.log %115 : vector<1x128xf32>
      %120 = arith.addf %118, %119 : vector<1x128xf32>
      %121 = arith.addi %3, %c1_i32 : i32
      %122 = arith.sitofp %121 : i32 to f32
      %cst_16 = arith.constant 1.000000e+00 : f32
      %123 = arith.cmpf oge, %122, %cst_16 : f32
      %124 = vector.broadcast %122 : f32 to vector<1x128xf32>
      %125 = arith.cmpf ogt, %12, %124 : vector<1x128xf32>
      %126 = vector.broadcast %123 : i1 to vector<1x128xi1>
      %127 = arith.andi %126, %125 : vector<1x128xi1>
      %128 = vector.shape_cast %127 : vector<1x128xi1> to vector<1x128xi1>
      %129 = vector.broadcast %128 : vector<1x128xi1> to vector<4x128xi1>
      %130 = arith.select %129, %117, %74 : vector<4x128xi1>, vector<4x128xf32>
      %131 = arith.select %127, %120, %75 : vector<1x128xi1>, vector<1x128xf32>
      %c2_i32 = arith.constant 2 : i32
      %132 = arith.index_cast %c2_i32 : i32 to index
      %c0_17 = arith.constant 0 : index
      %c0_18 = arith.constant 0 : index
      %133 = vector.load %arg3[%132, %c0_17, %c0_18] : memref<8x4x128xf32, #tpu.memory_space<vmem>>, vector<1x4x128xf32>
      %134 = vector.shape_cast %133 : vector<1x4x128xf32> to vector<4x128xf32>
      %135 = vector.extract_strided_slice %134 {offsets = [0, 0], sizes = [1, 128], strides = [1, 1]} : vector<4x128xf32> to vector<1x128xf32>
      %136 = vector.extract_strided_slice %134 {offsets = [1, 0], sizes = [1, 128], strides = [1, 1]} : vector<4x128xf32> to vector<1x128xf32>
      %137 = arith.maximumf %135, %136 : vector<1x128xf32>
      %138 = vector.extract_strided_slice %134 {offsets = [2, 0], sizes = [1, 128], strides = [1, 1]} : vector<4x128xf32> to vector<1x128xf32>
      %139 = arith.maximumf %137, %138 : vector<1x128xf32>
      %140 = vector.extract_strided_slice %134 {offsets = [3, 0], sizes = [1, 128], strides = [1, 1]} : vector<4x128xf32> to vector<1x128xf32>
      %141 = arith.maximumf %139, %140 : vector<1x128xf32>
      %142 = vector.broadcast %141 : vector<1x128xf32> to vector<4x128xf32>
      %143 = arith.subf %134, %142 : vector<4x128xf32>
      %144 = math.exp %143 : vector<4x128xf32>
      %145 = vector.extract_strided_slice %130 {offsets = [0, 0], sizes = [1, 128], strides = [1, 1]} : vector<4x128xf32> to vector<1x128xf32>
      %146 = vector.broadcast %14 : vector<4x1xf32> to vector<4x128xf32>
      %147 = vector.broadcast %145 : vector<1x128xf32> to vector<4x128xf32>
      %148 = arith.mulf %146, %147 : vector<4x128xf32>
      %149 = vector.extract_strided_slice %130 {offsets = [1, 0], sizes = [1, 128], strides = [1, 1]} : vector<4x128xf32> to vector<1x128xf32>
      %150 = vector.broadcast %15 : vector<4x1xf32> to vector<4x128xf32>
      %151 = vector.broadcast %149 : vector<1x128xf32> to vector<4x128xf32>
      %152 = arith.mulf %150, %151 : vector<4x128xf32>
      %153 = arith.addf %148, %152 : vector<4x128xf32>
      %154 = vector.extract_strided_slice %130 {offsets = [2, 0], sizes = [1, 128], strides = [1, 1]} : vector<4x128xf32> to vector<1x128xf32>
      %155 = vector.broadcast %16 : vector<4x1xf32> to vector<4x128xf32>
      %156 = vector.broadcast %154 : vector<1x128xf32> to vector<4x128xf32>
      %157 = arith.mulf %155, %156 : vector<4x128xf32>
      %158 = arith.addf %153, %157 : vector<4x128xf32>
      %159 = vector.extract_strided_slice %130 {offsets = [3, 0], sizes = [1, 128], strides = [1, 1]} : vector<4x128xf32> to vector<1x128xf32>
      %160 = vector.broadcast %17 : vector<4x1xf32> to vector<4x128xf32>
      %161 = vector.broadcast %159 : vector<1x128xf32> to vector<4x128xf32>
      %162 = arith.mulf %160, %161 : vector<4x128xf32>
      %163 = arith.addf %158, %162 : vector<4x128xf32>
      %164 = arith.mulf %163, %144 : vector<4x128xf32>
      %165 = vector.extract_strided_slice %164 {offsets = [0, 0], sizes = [1, 128], strides = [1, 1]} : vector<4x128xf32> to vector<1x128xf32>
      %166 = vector.extract_strided_slice %164 {offsets = [1, 0], sizes = [1, 128], strides = [1, 1]} : vector<4x128xf32> to vector<1x128xf32>
      %167 = arith.maximumf %165, %166 : vector<1x128xf32>
      %168 = vector.extract_strided_slice %164 {offsets = [2, 0], sizes = [1, 128], strides = [1, 1]} : vector<4x128xf32> to vector<1x128xf32>
      %169 = arith.maximumf %167, %168 : vector<1x128xf32>
      %170 = vector.extract_strided_slice %164 {offsets = [3, 0], sizes = [1, 128], strides = [1, 1]} : vector<4x128xf32> to vector<1x128xf32>
      %171 = arith.maximumf %169, %170 : vector<1x128xf32>
      %172 = vector.broadcast %171 : vector<1x128xf32> to vector<4x128xf32>
      %173 = arith.divf %164, %172 : vector<4x128xf32>
      %174 = arith.addf %131, %141 : vector<1x128xf32>
      %175 = math.log %171 : vector<1x128xf32>
      %176 = arith.addf %174, %175 : vector<1x128xf32>
      %177 = arith.addi %3, %c2_i32 : i32
      %178 = arith.sitofp %177 : i32 to f32
      %cst_19 = arith.constant 1.000000e+00 : f32
      %179 = arith.cmpf oge, %178, %cst_19 : f32
      %180 = vector.broadcast %178 : f32 to vector<1x128xf32>
      %181 = arith.cmpf ogt, %12, %180 : vector<1x128xf32>
      %182 = vector.broadcast %179 : i1 to vector<1x128xi1>
      %183 = arith.andi %182, %181 : vector<1x128xi1>
      %184 = vector.shape_cast %183 : vector<1x128xi1> to vector<1x128xi1>
      %185 = vector.broadcast %184 : vector<1x128xi1> to vector<4x128xi1>
      %186 = arith.select %185, %173, %130 : vector<4x128xi1>, vector<4x128xf32>
      %187 = arith.select %183, %176, %131 : vector<1x128xi1>, vector<1x128xf32>
      %c3_i32 = arith.constant 3 : i32
      %188 = arith.index_cast %c3_i32 : i32 to index
      %c0_20 = arith.constant 0 : index
      %c0_21 = arith.constant 0 : index
      %189 = vector.load %arg3[%188, %c0_20, %c0_21] : memref<8x4x128xf32, #tpu.memory_space<vmem>>, vector<1x4x128xf32>
      %190 = vector.shape_cast %189 : vector<1x4x128xf32> to vector<4x128xf32>
      %191 = vector.extract_strided_slice %190 {offsets = [0, 0], sizes = [1, 128], strides = [1, 1]} : vector<4x128xf32> to vector<1x128xf32>
      %192 = vector.extract_strided_slice %190 {offsets = [1, 0], sizes = [1, 128], strides = [1, 1]} : vector<4x128xf32> to vector<1x128xf32>
      %193 = arith.maximumf %191, %192 : vector<1x128xf32>
      %194 = vector.extract_strided_slice %190 {offsets = [2, 0], sizes = [1, 128], strides = [1, 1]} : vector<4x128xf32> to vector<1x128xf32>
      %195 = arith.maximumf %193, %194 : vector<1x128xf32>
      %196 = vector.extract_strided_slice %190 {offsets = [3, 0], sizes = [1, 128], strides = [1, 1]} : vector<4x128xf32> to vector<1x128xf32>
      %197 = arith.maximumf %195, %196 : vector<1x128xf32>
      %198 = vector.broadcast %197 : vector<1x128xf32> to vector<4x128xf32>
      %199 = arith.subf %190, %198 : vector<4x128xf32>
      %200 = math.exp %199 : vector<4x128xf32>
      %201 = vector.extract_strided_slice %186 {offsets = [0, 0], sizes = [1, 128], strides = [1, 1]} : vector<4x128xf32> to vector<1x128xf32>
      %202 = vector.broadcast %14 : vector<4x1xf32> to vector<4x128xf32>
      %203 = vector.broadcast %201 : vector<1x128xf32> to vector<4x128xf32>
      %204 = arith.mulf %202, %203 : vector<4x128xf32>
      %205 = vector.extract_strided_slice %186 {offsets = [1, 0], sizes = [1, 128], strides = [1, 1]} : vector<4x128xf32> to vector<1x128xf32>
      %206 = vector.broadcast %15 : vector<4x1xf32> to vector<4x128xf32>
      %207 = vector.broadcast %205 : vector<1x128xf32> to vector<4x128xf32>
      %208 = arith.mulf %206, %207 : vector<4x128xf32>
      %209 = arith.addf %204, %208 : vector<4x128xf32>
      %210 = vector.extract_strided_slice %186 {offsets = [2, 0], sizes = [1, 128], strides = [1, 1]} : vector<4x128xf32> to vector<1x128xf32>
      %211 = vector.broadcast %16 : vector<4x1xf32> to vector<4x128xf32>
      %212 = vector.broadcast %210 : vector<1x128xf32> to vector<4x128xf32>
      %213 = arith.mulf %211, %212 : vector<4x128xf32>
      %214 = arith.addf %209, %213 : vector<4x128xf32>
      %215 = vector.extract_strided_slice %186 {offsets = [3, 0], sizes = [1, 128], strides = [1, 1]} : vector<4x128xf32> to vector<1x128xf32>
      %216 = vector.broadcast %17 : vector<4x1xf32> to vector<4x128xf32>
      %217 = vector.broadcast %215 : vector<1x128xf32> to vector<4x128xf32>
      %218 = arith.mulf %216, %217 : vector<4x128xf32>
      %219 = arith.addf %214, %218 : vector<4x128xf32>
      %220 = arith.mulf %219, %200 : vector<4x128xf32>
      %221 = vector.extract_strided_slice %220 {offsets = [0, 0], sizes = [1, 128], strides = [1, 1]} : vector<4x128xf32> to vector<1x128xf32>
      %222 = vector.extract_strided_slice %220 {offsets = [1, 0], sizes = [1, 128], strides = [1, 1]} : vector<4x128xf32> to vector<1x128xf32>
      %223 = arith.maximumf %221, %222 : vector<1x128xf32>
      %224 = vector.extract_strided_slice %220 {offsets = [2, 0], sizes = [1, 128], strides = [1, 1]} : vector<4x128xf32> to vector<1x128xf32>
      %225 = arith.maximumf %223, %224 : vector<1x128xf32>
      %226 = vector.extract_strided_slice %220 {offsets = [3, 0], sizes = [1, 128], strides = [1, 1]} : vector<4x128xf32> to vector<1x128xf32>
      %227 = arith.maximumf %225, %226 : vector<1x128xf32>
      %228 = vector.broadcast %227 : vector<1x128xf32> to vector<4x128xf32>
      %229 = arith.divf %220, %228 : vector<4x128xf32>
      %230 = arith.addf %187, %197 : vector<1x128xf32>
      %231 = math.log %227 : vector<1x128xf32>
      %232 = arith.addf %230, %231 : vector<1x128xf32>
      %233 = arith.addi %3, %c3_i32 : i32
      %234 = arith.sitofp %233 : i32 to f32
      %cst_22 = arith.constant 1.000000e+00 : f32
      %235 = arith.cmpf oge, %234, %cst_22 : f32
      %236 = vector.broadcast %234 : f32 to vector<1x128xf32>
      %237 = arith.cmpf ogt, %12, %236 : vector<1x128xf32>
      %238 = vector.broadcast %235 : i1 to vector<1x128xi1>
      %239 = arith.andi %238, %237 : vector<1x128xi1>
      %240 = vector.shape_cast %239 : vector<1x128xi1> to vector<1x128xi1>
      %241 = vector.broadcast %240 : vector<1x128xi1> to vector<4x128xi1>
      %242 = arith.select %241, %229, %186 : vector<4x128xi1>, vector<4x128xf32>
      %243 = arith.select %239, %232, %187 : vector<1x128xi1>, vector<1x128xf32>
      %c4_i32 = arith.constant 4 : i32
      %244 = arith.index_cast %c4_i32 : i32 to index
      %c0_23 = arith.constant 0 : index
      %c0_24 = arith.constant 0 : index
      %245 = vector.load %arg3[%244, %c0_23, %c0_24] : memref<8x4x128xf32, #tpu.memory_space<vmem>>, vector<1x4x128xf32>
      %246 = vector.shape_cast %245 : vector<1x4x128xf32> to vector<4x128xf32>
      %247 = vector.extract_strided_slice %246 {offsets = [0, 0], sizes = [1, 128], strides = [1, 1]} : vector<4x128xf32> to vector<1x128xf32>
      %248 = vector.extract_strided_slice %246 {offsets = [1, 0], sizes = [1, 128], strides = [1, 1]} : vector<4x128xf32> to vector<1x128xf32>
      %249 = arith.maximumf %247, %248 : vector<1x128xf32>
      %250 = vector.extract_strided_slice %246 {offsets = [2, 0], sizes = [1, 128], strides = [1, 1]} : vector<4x128xf32> to vector<1x128xf32>
      %251 = arith.maximumf %249, %250 : vector<1x128xf32>
      %252 = vector.extract_strided_slice %246 {offsets = [3, 0], sizes = [1, 128], strides = [1, 1]} : vector<4x128xf32> to vector<1x128xf32>
      %253 = arith.maximumf %251, %252 : vector<1x128xf32>
      %254 = vector.broadcast %253 : vector<1x128xf32> to vector<4x128xf32>
      %255 = arith.subf %246, %254 : vector<4x128xf32>
      %256 = math.exp %255 : vector<4x128xf32>
      %257 = vector.extract_strided_slice %242 {offsets = [0, 0], sizes = [1, 128], strides = [1, 1]} : vector<4x128xf32> to vector<1x128xf32>
      %258 = vector.broadcast %14 : vector<4x1xf32> to vector<4x128xf32>
      %259 = vector.broadcast %257 : vector<1x128xf32> to vector<4x128xf32>
      %260 = arith.mulf %258, %259 : vector<4x128xf32>
      %261 = vector.extract_strided_slice %242 {offsets = [1, 0], sizes = [1, 128], strides = [1, 1]} : vector<4x128xf32> to vector<1x128xf32>
      %262 = vector.broadcast %15 : vector<4x1xf32> to vector<4x128xf32>
      %263 = vector.broadcast %261 : vector<1x128xf32> to vector<4x128xf32>
      %264 = arith.mulf %262, %263 : vector<4x128xf32>
      %265 = arith.addf %260, %264 : vector<4x128xf32>
      %266 = vector.extract_strided_slice %242 {offsets = [2, 0], sizes = [1, 128], strides = [1, 1]} : vector<4x128xf32> to vector<1x128xf32>
      %267 = vector.broadcast %16 : vector<4x1xf32> to vector<4x128xf32>
      %268 = vector.broadcast %266 : vector<1x128xf32> to vector<4x128xf32>
      %269 = arith.mulf %267, %268 : vector<4x128xf32>
      %270 = arith.addf %265, %269 : vector<4x128xf32>
      %271 = vector.extract_strided_slice %242 {offsets = [3, 0], sizes = [1, 128], strides = [1, 1]} : vector<4x128xf32> to vector<1x128xf32>
      %272 = vector.broadcast %17 : vector<4x1xf32> to vector<4x128xf32>
      %273 = vector.broadcast %271 : vector<1x128xf32> to vector<4x128xf32>
      %274 = arith.mulf %272, %273 : vector<4x128xf32>
      %275 = arith.addf %270, %274 : vector<4x128xf32>
      %276 = arith.mulf %275, %256 : vector<4x128xf32>
      %277 = vector.extract_strided_slice %276 {offsets = [0, 0], sizes = [1, 128], strides = [1, 1]} : vector<4x128xf32> to vector<1x128xf32>
      %278 = vector.extract_strided_slice %276 {offsets = [1, 0], sizes = [1, 128], strides = [1, 1]} : vector<4x128xf32> to vector<1x128xf32>
      %279 = arith.maximumf %277, %278 : vector<1x128xf32>
      %280 = vector.extract_strided_slice %276 {offsets = [2, 0], sizes = [1, 128], strides = [1, 1]} : vector<4x128xf32> to vector<1x128xf32>
      %281 = arith.maximumf %279, %280 : vector<1x128xf32>
      %282 = vector.extract_strided_slice %276 {offsets = [3, 0], sizes = [1, 128], strides = [1, 1]} : vector<4x128xf32> to vector<1x128xf32>
      %283 = arith.maximumf %281, %282 : vector<1x128xf32>
      %284 = vector.broadcast %283 : vector<1x128xf32> to vector<4x128xf32>
      %285 = arith.divf %276, %284 : vector<4x128xf32>
      %286 = arith.addf %243, %253 : vector<1x128xf32>
      %287 = math.log %283 : vector<1x128xf32>
      %288 = arith.addf %286, %287 : vector<1x128xf32>
      %289 = arith.addi %3, %c4_i32 : i32
      %290 = arith.sitofp %289 : i32 to f32
      %cst_25 = arith.constant 1.000000e+00 : f32
      %291 = arith.cmpf oge, %290, %cst_25 : f32
      %292 = vector.broadcast %290 : f32 to vector<1x128xf32>
      %293 = arith.cmpf ogt, %12, %292 : vector<1x128xf32>
      %294 = vector.broadcast %291 : i1 to vector<1x128xi1>
      %295 = arith.andi %294, %293 : vector<1x128xi1>
      %296 = vector.shape_cast %295 : vector<1x128xi1> to vector<1x128xi1>
      %297 = vector.broadcast %296 : vector<1x128xi1> to vector<4x128xi1>
      %298 = arith.select %297, %285, %242 : vector<4x128xi1>, vector<4x128xf32>
      %299 = arith.select %295, %288, %243 : vector<1x128xi1>, vector<1x128xf32>
      %c5_i32 = arith.constant 5 : i32
      %300 = arith.index_cast %c5_i32 : i32 to index
      %c0_26 = arith.constant 0 : index
      %c0_27 = arith.constant 0 : index
      %301 = vector.load %arg3[%300, %c0_26, %c0_27] : memref<8x4x128xf32, #tpu.memory_space<vmem>>, vector<1x4x128xf32>
      %302 = vector.shape_cast %301 : vector<1x4x128xf32> to vector<4x128xf32>
      %303 = vector.extract_strided_slice %302 {offsets = [0, 0], sizes = [1, 128], strides = [1, 1]} : vector<4x128xf32> to vector<1x128xf32>
      %304 = vector.extract_strided_slice %302 {offsets = [1, 0], sizes = [1, 128], strides = [1, 1]} : vector<4x128xf32> to vector<1x128xf32>
      %305 = arith.maximumf %303, %304 : vector<1x128xf32>
      %306 = vector.extract_strided_slice %302 {offsets = [2, 0], sizes = [1, 128], strides = [1, 1]} : vector<4x128xf32> to vector<1x128xf32>
      %307 = arith.maximumf %305, %306 : vector<1x128xf32>
      %308 = vector.extract_strided_slice %302 {offsets = [3, 0], sizes = [1, 128], strides = [1, 1]} : vector<4x128xf32> to vector<1x128xf32>
      %309 = arith.maximumf %307, %308 : vector<1x128xf32>
      %310 = vector.broadcast %309 : vector<1x128xf32> to vector<4x128xf32>
      %311 = arith.subf %302, %310 : vector<4x128xf32>
      %312 = math.exp %311 : vector<4x128xf32>
      %313 = vector.extract_strided_slice %298 {offsets = [0, 0], sizes = [1, 128], strides = [1, 1]} : vector<4x128xf32> to vector<1x128xf32>
      %314 = vector.broadcast %14 : vector<4x1xf32> to vector<4x128xf32>
      %315 = vector.broadcast %313 : vector<1x128xf32> to vector<4x128xf32>
      %316 = arith.mulf %314, %315 : vector<4x128xf32>
      %317 = vector.extract_strided_slice %298 {offsets = [1, 0], sizes = [1, 128], strides = [1, 1]} : vector<4x128xf32> to vector<1x128xf32>
      %318 = vector.broadcast %15 : vector<4x1xf32> to vector<4x128xf32>
      %319 = vector.broadcast %317 : vector<1x128xf32> to vector<4x128xf32>
      %320 = arith.mulf %318, %319 : vector<4x128xf32>
      %321 = arith.addf %316, %320 : vector<4x128xf32>
      %322 = vector.extract_strided_slice %298 {offsets = [2, 0], sizes = [1, 128], strides = [1, 1]} : vector<4x128xf32> to vector<1x128xf32>
      %323 = vector.broadcast %16 : vector<4x1xf32> to vector<4x128xf32>
      %324 = vector.broadcast %322 : vector<1x128xf32> to vector<4x128xf32>
      %325 = arith.mulf %323, %324 : vector<4x128xf32>
      %326 = arith.addf %321, %325 : vector<4x128xf32>
      %327 = vector.extract_strided_slice %298 {offsets = [3, 0], sizes = [1, 128], strides = [1, 1]} : vector<4x128xf32> to vector<1x128xf32>
      %328 = vector.broadcast %17 : vector<4x1xf32> to vector<4x128xf32>
      %329 = vector.broadcast %327 : vector<1x128xf32> to vector<4x128xf32>
      %330 = arith.mulf %328, %329 : vector<4x128xf32>
      %331 = arith.addf %326, %330 : vector<4x128xf32>
      %332 = arith.mulf %331, %312 : vector<4x128xf32>
      %333 = vector.extract_strided_slice %332 {offsets = [0, 0], sizes = [1, 128], strides = [1, 1]} : vector<4x128xf32> to vector<1x128xf32>
      %334 = vector.extract_strided_slice %332 {offsets = [1, 0], sizes = [1, 128], strides = [1, 1]} : vector<4x128xf32> to vector<1x128xf32>
      %335 = arith.maximumf %333, %334 : vector<1x128xf32>
      %336 = vector.extract_strided_slice %332 {offsets = [2, 0], sizes = [1, 128], strides = [1, 1]} : vector<4x128xf32> to vector<1x128xf32>
      %337 = arith.maximumf %335, %336 : vector<1x128xf32>
      %338 = vector.extract_strided_slice %332 {offsets = [3, 0], sizes = [1, 128], strides = [1, 1]} : vector<4x128xf32> to vector<1x128xf32>
      %339 = arith.maximumf %337, %338 : vector<1x128xf32>
      %340 = vector.broadcast %339 : vector<1x128xf32> to vector<4x128xf32>
      %341 = arith.divf %332, %340 : vector<4x128xf32>
      %342 = arith.addf %299, %309 : vector<1x128xf32>
      %343 = math.log %339 : vector<1x128xf32>
      %344 = arith.addf %342, %343 : vector<1x128xf32>
      %345 = arith.addi %3, %c5_i32 : i32
      %346 = arith.sitofp %345 : i32 to f32
      %cst_28 = arith.constant 1.000000e+00 : f32
      %347 = arith.cmpf oge, %346, %cst_28 : f32
      %348 = vector.broadcast %346 : f32 to vector<1x128xf32>
      %349 = arith.cmpf ogt, %12, %348 : vector<1x128xf32>
      %350 = vector.broadcast %347 : i1 to vector<1x128xi1>
      %351 = arith.andi %350, %349 : vector<1x128xi1>
      %352 = vector.shape_cast %351 : vector<1x128xi1> to vector<1x128xi1>
      %353 = vector.broadcast %352 : vector<1x128xi1> to vector<4x128xi1>
      %354 = arith.select %353, %341, %298 : vector<4x128xi1>, vector<4x128xf32>
      %355 = arith.select %351, %344, %299 : vector<1x128xi1>, vector<1x128xf32>
      %c6_i32 = arith.constant 6 : i32
      %356 = arith.index_cast %c6_i32 : i32 to index
      %c0_29 = arith.constant 0 : index
      %c0_30 = arith.constant 0 : index
      %357 = vector.load %arg3[%356, %c0_29, %c0_30] : memref<8x4x128xf32, #tpu.memory_space<vmem>>, vector<1x4x128xf32>
      %358 = vector.shape_cast %357 : vector<1x4x128xf32> to vector<4x128xf32>
      %359 = vector.extract_strided_slice %358 {offsets = [0, 0], sizes = [1, 128], strides = [1, 1]} : vector<4x128xf32> to vector<1x128xf32>
      %360 = vector.extract_strided_slice %358 {offsets = [1, 0], sizes = [1, 128], strides = [1, 1]} : vector<4x128xf32> to vector<1x128xf32>
      %361 = arith.maximumf %359, %360 : vector<1x128xf32>
      %362 = vector.extract_strided_slice %358 {offsets = [2, 0], sizes = [1, 128], strides = [1, 1]} : vector<4x128xf32> to vector<1x128xf32>
      %363 = arith.maximumf %361, %362 : vector<1x128xf32>
      %364 = vector.extract_strided_slice %358 {offsets = [3, 0], sizes = [1, 128], strides = [1, 1]} : vector<4x128xf32> to vector<1x128xf32>
      %365 = arith.maximumf %363, %364 : vector<1x128xf32>
      %366 = vector.broadcast %365 : vector<1x128xf32> to vector<4x128xf32>
      %367 = arith.subf %358, %366 : vector<4x128xf32>
      %368 = math.exp %367 : vector<4x128xf32>
      %369 = vector.extract_strided_slice %354 {offsets = [0, 0], sizes = [1, 128], strides = [1, 1]} : vector<4x128xf32> to vector<1x128xf32>
      %370 = vector.broadcast %14 : vector<4x1xf32> to vector<4x128xf32>
      %371 = vector.broadcast %369 : vector<1x128xf32> to vector<4x128xf32>
      %372 = arith.mulf %370, %371 : vector<4x128xf32>
      %373 = vector.extract_strided_slice %354 {offsets = [1, 0], sizes = [1, 128], strides = [1, 1]} : vector<4x128xf32> to vector<1x128xf32>
      %374 = vector.broadcast %15 : vector<4x1xf32> to vector<4x128xf32>
      %375 = vector.broadcast %373 : vector<1x128xf32> to vector<4x128xf32>
      %376 = arith.mulf %374, %375 : vector<4x128xf32>
      %377 = arith.addf %372, %376 : vector<4x128xf32>
      %378 = vector.extract_strided_slice %354 {offsets = [2, 0], sizes = [1, 128], strides = [1, 1]} : vector<4x128xf32> to vector<1x128xf32>
      %379 = vector.broadcast %16 : vector<4x1xf32> to vector<4x128xf32>
      %380 = vector.broadcast %378 : vector<1x128xf32> to vector<4x128xf32>
      %381 = arith.mulf %379, %380 : vector<4x128xf32>
      %382 = arith.addf %377, %381 : vector<4x128xf32>
      %383 = vector.extract_strided_slice %354 {offsets = [3, 0], sizes = [1, 128], strides = [1, 1]} : vector<4x128xf32> to vector<1x128xf32>
      %384 = vector.broadcast %17 : vector<4x1xf32> to vector<4x128xf32>
      %385 = vector.broadcast %383 : vector<1x128xf32> to vector<4x128xf32>
      %386 = arith.mulf %384, %385 : vector<4x128xf32>
      %387 = arith.addf %382, %386 : vector<4x128xf32>
      %388 = arith.mulf %387, %368 : vector<4x128xf32>
      %389 = vector.extract_strided_slice %388 {offsets = [0, 0], sizes = [1, 128], strides = [1, 1]} : vector<4x128xf32> to vector<1x128xf32>
      %390 = vector.extract_strided_slice %388 {offsets = [1, 0], sizes = [1, 128], strides = [1, 1]} : vector<4x128xf32> to vector<1x128xf32>
      %391 = arith.maximumf %389, %390 : vector<1x128xf32>
      %392 = vector.extract_strided_slice %388 {offsets = [2, 0], sizes = [1, 128], strides = [1, 1]} : vector<4x128xf32> to vector<1x128xf32>
      %393 = arith.maximumf %391, %392 : vector<1x128xf32>
      %394 = vector.extract_strided_slice %388 {offsets = [3, 0], sizes = [1, 128], strides = [1, 1]} : vector<4x128xf32> to vector<1x128xf32>
      %395 = arith.maximumf %393, %394 : vector<1x128xf32>
      %396 = vector.broadcast %395 : vector<1x128xf32> to vector<4x128xf32>
      %397 = arith.divf %388, %396 : vector<4x128xf32>
      %398 = arith.addf %355, %365 : vector<1x128xf32>
      %399 = math.log %395 : vector<1x128xf32>
      %400 = arith.addf %398, %399 : vector<1x128xf32>
      %401 = arith.addi %3, %c6_i32 : i32
      %402 = arith.sitofp %401 : i32 to f32
      %cst_31 = arith.constant 1.000000e+00 : f32
      %403 = arith.cmpf oge, %402, %cst_31 : f32
      %404 = vector.broadcast %402 : f32 to vector<1x128xf32>
      %405 = arith.cmpf ogt, %12, %404 : vector<1x128xf32>
      %406 = vector.broadcast %403 : i1 to vector<1x128xi1>
      %407 = arith.andi %406, %405 : vector<1x128xi1>
      %408 = vector.shape_cast %407 : vector<1x128xi1> to vector<1x128xi1>
      %409 = vector.broadcast %408 : vector<1x128xi1> to vector<4x128xi1>
      %410 = arith.select %409, %397, %354 : vector<4x128xi1>, vector<4x128xf32>
      %411 = arith.select %407, %400, %355 : vector<1x128xi1>, vector<1x128xf32>
      %c7_i32 = arith.constant 7 : i32
      %412 = arith.index_cast %c7_i32 : i32 to index
      %c0_32 = arith.constant 0 : index
      %c0_33 = arith.constant 0 : index
      %413 = vector.load %arg3[%412, %c0_32, %c0_33] : memref<8x4x128xf32, #tpu.memory_space<vmem>>, vector<1x4x128xf32>
      %414 = vector.shape_cast %413 : vector<1x4x128xf32> to vector<4x128xf32>
      %415 = vector.extract_strided_slice %414 {offsets = [0, 0], sizes = [1, 128], strides = [1, 1]} : vector<4x128xf32> to vector<1x128xf32>
      %416 = vector.extract_strided_slice %414 {offsets = [1, 0], sizes = [1, 128], strides = [1, 1]} : vector<4x128xf32> to vector<1x128xf32>
      %417 = arith.maximumf %415, %416 : vector<1x128xf32>
      %418 = vector.extract_strided_slice %414 {offsets = [2, 0], sizes = [1, 128], strides = [1, 1]} : vector<4x128xf32> to vector<1x128xf32>
      %419 = arith.maximumf %417, %418 : vector<1x128xf32>
      %420 = vector.extract_strided_slice %414 {offsets = [3, 0], sizes = [1, 128], strides = [1, 1]} : vector<4x128xf32> to vector<1x128xf32>
      %421 = arith.maximumf %419, %420 : vector<1x128xf32>
      %422 = vector.broadcast %421 : vector<1x128xf32> to vector<4x128xf32>
      %423 = arith.subf %414, %422 : vector<4x128xf32>
      %424 = math.exp %423 : vector<4x128xf32>
      %425 = vector.extract_strided_slice %410 {offsets = [0, 0], sizes = [1, 128], strides = [1, 1]} : vector<4x128xf32> to vector<1x128xf32>
      %426 = vector.broadcast %14 : vector<4x1xf32> to vector<4x128xf32>
      %427 = vector.broadcast %425 : vector<1x128xf32> to vector<4x128xf32>
      %428 = arith.mulf %426, %427 : vector<4x128xf32>
      %429 = vector.extract_strided_slice %410 {offsets = [1, 0], sizes = [1, 128], strides = [1, 1]} : vector<4x128xf32> to vector<1x128xf32>
      %430 = vector.broadcast %15 : vector<4x1xf32> to vector<4x128xf32>
      %431 = vector.broadcast %429 : vector<1x128xf32> to vector<4x128xf32>
      %432 = arith.mulf %430, %431 : vector<4x128xf32>
      %433 = arith.addf %428, %432 : vector<4x128xf32>
      %434 = vector.extract_strided_slice %410 {offsets = [2, 0], sizes = [1, 128], strides = [1, 1]} : vector<4x128xf32> to vector<1x128xf32>
      %435 = vector.broadcast %16 : vector<4x1xf32> to vector<4x128xf32>
      %436 = vector.broadcast %434 : vector<1x128xf32> to vector<4x128xf32>
      %437 = arith.mulf %435, %436 : vector<4x128xf32>
      %438 = arith.addf %433, %437 : vector<4x128xf32>
      %439 = vector.extract_strided_slice %410 {offsets = [3, 0], sizes = [1, 128], strides = [1, 1]} : vector<4x128xf32> to vector<1x128xf32>
      %440 = vector.broadcast %17 : vector<4x1xf32> to vector<4x128xf32>
      %441 = vector.broadcast %439 : vector<1x128xf32> to vector<4x128xf32>
      %442 = arith.mulf %440, %441 : vector<4x128xf32>
      %443 = arith.addf %438, %442 : vector<4x128xf32>
      %444 = arith.mulf %443, %424 : vector<4x128xf32>
      %445 = vector.extract_strided_slice %444 {offsets = [0, 0], sizes = [1, 128], strides = [1, 1]} : vector<4x128xf32> to vector<1x128xf32>
      %446 = vector.extract_strided_slice %444 {offsets = [1, 0], sizes = [1, 128], strides = [1, 1]} : vector<4x128xf32> to vector<1x128xf32>
      %447 = arith.maximumf %445, %446 : vector<1x128xf32>
      %448 = vector.extract_strided_slice %444 {offsets = [2, 0], sizes = [1, 128], strides = [1, 1]} : vector<4x128xf32> to vector<1x128xf32>
      %449 = arith.maximumf %447, %448 : vector<1x128xf32>
      %450 = vector.extract_strided_slice %444 {offsets = [3, 0], sizes = [1, 128], strides = [1, 1]} : vector<4x128xf32> to vector<1x128xf32>
      %451 = arith.maximumf %449, %450 : vector<1x128xf32>
      %452 = vector.broadcast %451 : vector<1x128xf32> to vector<4x128xf32>
      %453 = arith.divf %444, %452 : vector<4x128xf32>
      %454 = arith.addf %411, %421 : vector<1x128xf32>
      %455 = math.log %451 : vector<1x128xf32>
      %456 = arith.addf %454, %455 : vector<1x128xf32>
      %457 = arith.addi %3, %c7_i32 : i32
      %458 = arith.sitofp %457 : i32 to f32
      %cst_34 = arith.constant 1.000000e+00 : f32
      %459 = arith.cmpf oge, %458, %cst_34 : f32
      %460 = vector.broadcast %458 : f32 to vector<1x128xf32>
      %461 = arith.cmpf ogt, %12, %460 : vector<1x128xf32>
      %462 = vector.broadcast %459 : i1 to vector<1x128xi1>
      %463 = arith.andi %462, %461 : vector<1x128xi1>
      %464 = vector.shape_cast %463 : vector<1x128xi1> to vector<1x128xi1>
      %465 = vector.broadcast %464 : vector<1x128xi1> to vector<4x128xi1>
      %466 = arith.select %465, %453, %410 : vector<4x128xi1>, vector<4x128xf32>
      %467 = arith.select %463, %456, %411 : vector<1x128xi1>, vector<1x128xf32>
      %c8_i32_35 = arith.constant 8 : i32
      %c0_36 = arith.constant 0 : index
      %c0_37 = arith.constant 0 : index
      %468 = vector.load %arg9[%c0_36, %c0_37] : memref<4x128xf32, #tpu.memory_space<vmem>>, vector<4x128xf32>
      tpu.vector_store %arg9[%c0_36, %c0_37], %466 {strides = array<i32>} : memref<4x128xf32, #tpu.memory_space<vmem>>, vector<4x128xf32>,
      %c0_38 = arith.constant 0 : index
      %c0_39 = arith.constant 0 : index
      %469 = vector.load %arg10[%c0_38, %c0_39] : memref<1x128xf32, #tpu.memory_space<vmem>>, vector<1x128xf32>
      tpu.vector_store %arg10[%c0_38, %c0_39], %467 {strides = array<i32>} : memref<1x128xf32, #tpu.memory_space<vmem>>, vector<1x128xf32>,
    } else {
    }
    %c0_i32_2 = arith.constant 0 : i32
    %9 = arith.cmpi eq, %arg1, %c0_i32_2 : i32
    %10 = arith.extui %9 : i1 to i32
    %c0_i32_3 = arith.constant 0 : i32
    %11 = arith.cmpi ne, %10, %c0_i32_3 : i32
    scf.if %11 {
      %c0 = arith.constant 0 : index
      %c0_4 = arith.constant 0 : index
      %12 = vector.load %arg9[%c0, %c0_4] : memref<4x128xf32, #tpu.memory_space<vmem>>, vector<4x128xf32>
      %c0_5 = arith.constant 0 : index
      %c0_6 = arith.constant 0 : index
      %13 = vector.load %arg6[%c0_5, %c0_6] : memref<4x1xf32, #tpu.memory_space<vmem>>, vector<4x1xf32>
      %14 = vector.broadcast %13 : vector<4x1xf32> to vector<4x128xf32>
      %15 = arith.mulf %12, %14 : vector<4x128xf32>
      %16 = vector.extract_strided_slice %15 {offsets = [0, 0], sizes = [1, 128], strides = [1, 1]} : vector<4x128xf32> to vector<1x128xf32>
      %17 = vector.extract_strided_slice %15 {offsets = [1, 0], sizes = [1, 128], strides = [1, 1]} : vector<4x128xf32> to vector<1x128xf32>
      %18 = arith.addf %16, %17 : vector<1x128xf32>
      %19 = vector.extract_strided_slice %15 {offsets = [2, 0], sizes = [1, 128], strides = [1, 1]} : vector<4x128xf32> to vector<1x128xf32>
      %20 = arith.addf %18, %19 : vector<1x128xf32>
      %21 = vector.extract_strided_slice %15 {offsets = [3, 0], sizes = [1, 128], strides = [1, 1]} : vector<4x128xf32> to vector<1x128xf32>
      %22 = arith.addf %20, %21 : vector<1x128xf32>
      %c0_7 = arith.constant 0 : index
      %c0_8 = arith.constant 0 : index
      %23 = vector.load %arg10[%c0_7, %c0_8] : memref<1x128xf32, #tpu.memory_space<vmem>>, vector<1x128xf32>
      %24 = math.log %22 : vector<1x128xf32>
      %25 = arith.addf %23, %24 : vector<1x128xf32>
      %c0_9 = arith.constant 0 : index
      %c0_10 = arith.constant 0 : index
      %26 = vector.load %arg8[%c0_9, %c0_10] : memref<1x128xf32, #tpu.memory_space<vmem>>, vector<1x128xf32>
      tpu.vector_store %arg8[%c0_9, %c0_10], %25 {strides = array<i32>} : memref<1x128xf32, #tpu.memory_space<vmem>>, vector<1x128xf32>,
    } else {
    }
    return
  }
  func.func @transform_0(%arg0: i32, %arg1: i32, %arg2: memref<1xi32, #tpu.memory_space<smem>>) -> (i32, i32, i32) {
    %c0_i32 = arith.constant 0 : i32
    %c0_i32_0 = arith.constant 0 : i32
    return %arg1, %c0_i32, %arg0 : i32, i32, i32
  }
  func.func @transform_1(%arg0: i32, %arg1: i32, %arg2: memref<1xi32, #tpu.memory_space<smem>>) -> (i32, i32) {
    %c0_i32 = arith.constant 0 : i32
    %c0_i32_0 = arith.constant 0 : i32
    return %c0_i32, %arg0 : i32, i32
  }
  func.func @transform_2(%arg0: i32, %arg1: i32, %arg2: memref<1xi32, #tpu.memory_space<smem>>) -> (i32, i32) {
    %c0_i32 = arith.constant 0 : i32
    %c0_i32_0 = arith.constant 0 : i32
    %c0_i32_1 = arith.constant 0 : i32
    return %c0_i32, %c0_i32_0 : i32, i32
  }
  func.func @transform_3(%arg0: i32, %arg1: i32, %arg2: memref<1xi32, #tpu.memory_space<smem>>) -> (i32, i32) {
    %c0_i32 = arith.constant 0 : i32
    %c0_i32_0 = arith.constant 0 : i32
    %c0_i32_1 = arith.constant 0 : i32
    return %c0_i32, %c0_i32_0 : i32, i32
  }
  func.func @transform_4(%arg0: i32, %arg1: i32, %arg2: memref<1xi32, #tpu.memory_space<smem>>) -> (i32, i32) {
    %c0_i32 = arith.constant 0 : i32
    %c0_i32_0 = arith.constant 0 : i32
    %c0_i32_1 = arith.constant 0 : i32
    return %c0_i32, %c0_i32_0 : i32, i32
  }
  func.func @transform_5(%arg0: i32, %arg1: i32, %arg2: memref<1xi32, #tpu.memory_space<smem>>) -> (i32, i32) {
    %c0_i32 = arith.constant 0 : i32
    %c0_i32_0 = arith.constant 0 : i32
    return %c0_i32, %arg0 : i32, i32
  }
}

</mosaic_0001>

<llo_original>
// kernel: crf_forward.1
$region0: #{crf_forward.1}
  #allocation0 [shape = 'u32[]', space=smem, size = 0x4, offset = 0x4, fixed_abs, tag = 'smem constant byte address 0x4 - core index']
  #allocation1 [shape = 'u32[144,128]{1,0:T(1,128)}', space=vmem, size = 0x12000, scoped, tag = 'internal scratch']
  #allocation2 [shape = 'f32[4,128]{1,0:T(4,128)}', space=vmem, size = 0x800, scoped, tag = 'scratch operand']
  #allocation3 [shape = 'f32[1,128]{1,0:T(1,128)}', space=vmem, size = 0x200, scoped, tag = 'scratch operand']
  #allocation4 [shape = 's32[1]{0}', space=sflag, size = 0x4, scoped, tag = 'scoped memory for crf_forward.1']
  #allocation5 [shape = 's32[1]{0:T(128)S(6)}', space=smem, size = 0x200, scoped, tag = 'prefetched SMEM operand 0']
  %s0 = inlined_call_operand.<no memory space> [shape: s32[1], index: 0, kind: input, shape index: {}]
  %s1 = inlined_call_operand.vmem [shape: f32[8,4,128], index: 1, kind: input, shape index: {}]
  %s2 = inlined_call_operand.vmem [shape: f32[1,128], index: 2, kind: input, shape index: {}]
  %s3 = inlined_call_operand.vmem [shape: f32[4,1], index: 3, kind: input, shape index: {}]
  %s4 = inlined_call_operand.vmem [shape: f32[4,1], index: 4, kind: input, shape index: {}]
  %s5 = inlined_call_operand.vmem [shape: f32[4,4], index: 5, kind: input, shape index: {}]
  %s6 = inlined_call_operand.vmem [shape: f32[1,128], index: 6, kind: output, shape index: {}]
  %s7 = sld [smem:[#allocation0]]
  $region42: #{crf_forward.1} parent=0
    _
  %s9 = ssub.s32 1, %s7
  %s10 = scalar_select 0, %s9, %s7
  %11 = sst [smem:[#allocation5]] %s0
  // Predicated region
  $region2: #{crf_forward.1} parent=0 // pred_check
    _
  $region3: #{crf_forward.1} parent=0 // pred_check_branch
    %13 = sbr.rel (0) target = $region5
  $region4: #{crf_forward.1} parent=0 // pred_region
    _
  $region5: #{crf_forward.1} parent=0 // pred_fallthru
    _
  // Predicated region
  $region6: #{crf_forward.1} parent=0 // pred_check
    _
  $region7: #{crf_forward.1} parent=0 // pred_check_branch
    %15 = sbr.rel (0) target = $region9
  $region8: #{crf_forward.1} parent=0 // pred_region
    _
  $region9: #{crf_forward.1} parent=0 // pred_fallthru
    _
  // Predicated region
  $region10: #{crf_forward.1} parent=0 // pred_check
    _
  $region11: #{crf_forward.1} parent=0 // pred_check_branch
    %17 = sbr.rel (0) target = $region13
  $region12: #{crf_forward.1} parent=0 // pred_region
    _
  $region13: #{crf_forward.1} parent=0 // pred_fallthru
    _
  // Predicated region
  $region14: #{crf_forward.1} parent=0 // pred_check
    _
  $region15: #{crf_forward.1} parent=0 // pred_check_branch
    %19 = sbr.rel (0) target = $region17
  $region16: #{crf_forward.1} parent=0 // pred_region
    _
  $region17: #{crf_forward.1} parent=0 // pred_fallthru
    _
  // Predicated region
  $region18: #{crf_forward.1} parent=0 // pred_check
    _
  $region19: #{crf_forward.1} parent=0 // pred_check_branch
    %21 = sbr.rel (0) target = $region21
  $region20: #{crf_forward.1} parent=0 // pred_region
    _
  $region21: #{crf_forward.1} parent=0 // pred_fallthru
    _
  %p22 = scmp.eq.s32.totalorder 0, 0
  // Predicated region
  $region22: #{crf_forward.1} parent=0 // pred_check
    %p23 = pneg %p22
  $region23: #{crf_forward.1} parent=0 // pred_check_branch
    %25 = sbr.rel (%p23) target = $region25
  $region24: #{crf_forward.1} parent=0 // pred_region
    %v26 = vld [vmem:[%s3] sm:$0xf]
    %v27 = vld [vmem:[%s1] sm:$0xf]
    %29 = vset.pattern.permute.xlu0 0
    %30 = vperm.xlu0 %29, %v26
    %v31 = vpop.permute.xlu0 %30
    %v33 = vadd.f32 %v31, %v27
    %v35 = vrot.slane %v33, 1
    %v37 = vmax.f32 %v33, %v35
    %v38 = vrot.slane %v33, 2
    %v40 = vmax.f32 %v37, %v38
    %v41 = vrot.slane %v33, 3
    %v43 = vmax.f32 %v40, %v41
    %v44 = vlaneseq
    %v45 = vshrl.u32 %v44, 7
    %v46 = vsub.s32 0, %v45
    %v47 = vrot.slane %v43, %v46
    %v48 = vsub.f32 %v33, %v47
    %v49 = vmul.f32 %v48, 1.442695
    %v50 = vpow.pop %v49
    %51 = vst [vmem:[#allocation2] sm:$0xf] %v50
    %52 = vst [vmem:[#allocation3] sm:$0x1] %v43
  $region25: #{crf_forward.1} parent=0 // pred_fallthru
    _
  %s53 = smul.u32 0, 8
  %s54 = sld [smem:[#allocation5]]
  %p55 = scmp.lt.s32.totalorder %s53, %s54
  // Predicated region
  $region26: #{crf_forward.1} parent=0 // pred_check
    %p56 = pneg %p55
  $region27: #{crf_forward.1} parent=0 // pred_check_branch
    %58 = sbr.rel (%p56) target = $region29
  $region28: #{crf_forward.1} parent=0 // pred_region
    %v59 = vld [vmem:[%s2] sm:$0x1]
    %v60 = vld [vmem:[%s5] sm:$0xf]
    %v61 = vld [vmem:[#allocation2] sm:$0xf]
    %v62 = vld [vmem:[#allocation3] sm:$0x1]
    %v63 = vld [vmem:[%s1] sm:$0xf]
    %v65 = vrot.slane %v63, 1
    %v67 = vmax.f32 %v63, %v65
    %v68 = vrot.slane %v63, 2
    %v70 = vmax.f32 %v67, %v68
    %v71 = vrot.slane %v63, 3
    %v73 = vmax.f32 %v70, %v71
    %v74 = vlaneseq
    %v75 = vshrl.u32 %v74, 7
    %v76 = vsub.s32 0, %v75
    %v77 = vrot.slane %v73, %v76
    %v78 = vsub.f32 %v63, %v77
    %v79 = vmul.f32 %v78, 1.442695
    %v80 = vpow.pop %v79
    %82 = vset.pattern.permute.xlu0 0
    %83 = vperm.xlu0 %82, %v60
    %v84 = vpop.permute.xlu0 %83
    %v86 = vlaneseq
    %v87 = vshrl.u32 %v86, 7
    %v88 = vsub.s32 0, %v87
    %v89 = vrot.slane %v61, %v88
    %v90 = vmul.f32 %v84, %v89
    %91 = vset.pattern.permute.xlu0 1
    %92 = vperm.xlu0 %91, %v60
    %v93 = vpop.permute.xlu0 %92
    %v95 = vlaneseq
    %v96 = vshrl.u32 %v95, 7
    %v97 = vsub.s32 1, %v96
    %v98 = vrot.slane %v61, %v97
    %v99 = vmul.f32 %v93, %v98
    %v100 = vadd.f32 %v90, %v99
    %101 = vset.pattern.permute.xlu0 2
    %102 = vperm.xlu0 %101, %v60
    %v103 = vpop.permute.xlu0 %102
    %v105 = vlaneseq
    %v106 = vshrl.u32 %v105, 7
    %v107 = vsub.s32 2, %v106
    %v108 = vrot.slane %v61, %v107
    %v109 = vmul.f32 %v103, %v108
    %v110 = vadd.f32 %v100, %v109
    %111 = vset.pattern.permute.xlu0 3
    %112 = vperm.xlu0 %111, %v60
    %v113 = vpop.permute.xlu0 %112
    %v115 = vlaneseq
    %v116 = vshrl.u32 %v115, 7
    %v117 = vsub.s32 3, %v116
    %v118 = vrot.slane %v61, %v117
    %v119 = vmul.f32 %v113, %v118
    %v120 = vadd.f32 %v110, %v119
    %v121 = vmul.f32 %v120, %v80
    %v123 = vrot.slane %v121, 1
    %v125 = vmax.f32 %v121, %v123
    %v126 = vrot.slane %v121, 2
    %v128 = vmax.f32 %v125, %v126
    %v129 = vrot.slane %v121, 3
    %v131 = vmax.f32 %v128, %v129
    %v132 = vlaneseq
    %v133 = vshrl.u32 %v132, 7
    %v134 = vsub.s32 0, %v133
    %v135 = vrot.slane %v131, %v134
    %v136 = vrcp.pop %v135
    %v137 = vmul.f32 %v121, %v136
    %v138 = vadd.f32 %v62, %v73
    %v139 = vlog2.pop %v131
    %v140 = vmul.f32 %v139, 0.6931472
    %v141 = vadd.f32 %v138, %v140
    %s142 = scvt.s32.f32 %s53
    %p143 = scmp.ge.s32.totalorder %s53, 1
    %v144 = vstv %s142
    %vm145 = vcmp.gt.f32.partialorder %v59, %v144
    %s146 = scalar_select %p143, 1, 0
    %v147 = vstv %s146
    %vm148 = vcmp.eq.s32.totalorder %v147, 1
    %vm149 = vmand %vm148, %vm145
    %v150 = vsel %vm149, 1, 0
    %v151 = vlaneseq
    %v152 = vshrl.u32 %v151, 7
    %v153 = vsub.s32 0, %v152
    %v154 = vrot.slane %v150, %v153
    %vm155 = vcmp.eq.s32.totalorder %v154, 1
    %v156 = vsel %vm155, %v137, %v61
    %v157 = vsel %vm149, %v141, %v62
    %s158 = scalar_lea.vmem %s1, 4
    %v159 = vld [vmem:[%s158] sm:$0xf]
    %v161 = vrot.slane %v159, 1
    %v163 = vmax.f32 %v159, %v161
    %v164 = vrot.slane %v159, 2
    %v166 = vmax.f32 %v163, %v164
    %v167 = vrot.slane %v159, 3
    %v169 = vmax.f32 %v166, %v167
    %v170 = vlaneseq
    %v171 = vshrl.u32 %v170, 7
    %v172 = vsub.s32 0, %v171
    %v173 = vrot.slane %v169, %v172
    %v174 = vsub.f32 %v159, %v173
    %v175 = vmul.f32 %v174, 1.442695
    %v176 = vpow.pop %v175
    %v177 = vlaneseq
    %v178 = vshrl.u32 %v177, 7
    %v179 = vsub.s32 0, %v178
    %v180 = vrot.slane %v156, %v179
    %v181 = vmul.f32 %v84, %v180
    %v182 = vlaneseq
    %v183 = vshrl.u32 %v182, 7
    %v184 = vsub.s32 1, %v183
    %v185 = vrot.slane %v156, %v184
    %v186 = vmul.f32 %v93, %v185
    %v187 = vadd.f32 %v181, %v186
    %v188 = vlaneseq
    %v189 = vshrl.u32 %v188, 7
    %v190 = vsub.s32 2, %v189
    %v191 = vrot.slane %v156, %v190
    %v192 = vmul.f32 %v103, %v191
    %v193 = vadd.f32 %v187, %v192
    %v194 = vlaneseq
    %v195 = vshrl.u32 %v194, 7
    %v196 = vsub.s32 3, %v195
    %v197 = vrot.slane %v156, %v196
    %v198 = vmul.f32 %v113, %v197
    %v199 = vadd.f32 %v193, %v198
    %v200 = vmul.f32 %v199, %v176
    %v202 = vrot.slane %v200, 1
    %v204 = vmax.f32 %v200, %v202
    %v205 = vrot.slane %v200, 2
    %v207 = vmax.f32 %v204, %v205
    %v208 = vrot.slane %v200, 3
    %v210 = vmax.f32 %v207, %v208
    %v211 = vlaneseq
    %v212 = vshrl.u32 %v211, 7
    %v213 = vsub.s32 0, %v212
    %v214 = vrot.slane %v210, %v213
    %v215 = vrcp.pop %v214
    %v216 = vmul.f32 %v200, %v215
    %v217 = vadd.f32 %v157, %v169
    %v218 = vlog2.pop %v210
    %v219 = vmul.f32 %v218, 0.6931472
    %v220 = vadd.f32 %v217, %v219
    %s221 = sadd.s32 %s53, 1
    %s222 = scvt.s32.f32 %s221
    %p223 = scmp.ge.s32.totalorder %s221, 1
    %v224 = vstv %s222
    %vm225 = vcmp.gt.f32.partialorder %v59, %v224
    %s226 = scalar_select %p223, 1, 0
    %v227 = vstv %s226
    %vm228 = vcmp.eq.s32.totalorder %v227, 1
    %vm229 = vmand %vm228, %vm225
    %v230 = vsel %vm229, 1, 0
    %v231 = vlaneseq
    %v232 = vshrl.u32 %v231, 7
    %v233 = vsub.s32 0, %v232
    %v234 = vrot.slane %v230, %v233
    %vm235 = vcmp.eq.s32.totalorder %v234, 1
    %v236 = vsel %vm235, %v216, %v156
    %v237 = vsel %vm229, %v220, %v157
    %s238 = scalar_lea.vmem %s1, 8
    %v239 = vld [vmem:[%s238] sm:$0xf]
    %v241 = vrot.slane %v239, 1
    %v243 = vmax.f32 %v239, %v241
    %v244 = vrot.slane %v239, 2
    %v246 = vmax.f32 %v243, %v244
    %v247 = vrot.slane %v239, 3
    %v249 = vmax.f32 %v246, %v247
    %v250 = vlaneseq
    %v251 = vshrl.u32 %v250, 7
    %v252 = vsub.s32 0, %v251
    %v253 = vrot.slane %v249, %v252
    %v254 = vsub.f32 %v239, %v253
    %v255 = vmul.f32 %v254, 1.442695
    %v256 = vpow.pop %v255
    %v257 = vlaneseq
    %v258 = vshrl.u32 %v257, 7
    %v259 = vsub.s32 0, %v258
    %v260 = vrot.slane %v236, %v259
    %v261 = vmul.f32 %v84, %v260
    %v262 = vlaneseq
    %v263 = vshrl.u32 %v262, 7
    %v264 = vsub.s32 1, %v263
    %v265 = vrot.slane %v236, %v264
    %v266 = vmul.f32 %v93, %v265
    %v267 = vadd.f32 %v261, %v266
    %v268 = vlaneseq
    %v269 = vshrl.u32 %v268, 7
    %v270 = vsub.s32 2, %v269
    %v271 = vrot.slane %v236, %v270
    %v272 = vmul.f32 %v103, %v271
    %v273 = vadd.f32 %v267, %v272
    %v274 = vlaneseq
    %v275 = vshrl.u32 %v274, 7
    %v276 = vsub.s32 3, %v275
    %v277 = vrot.slane %v236, %v276
    %v278 = vmul.f32 %v113, %v277
    %v279 = vadd.f32 %v273, %v278
    %v280 = vmul.f32 %v279, %v256
    %v282 = vrot.slane %v280, 1
    %v284 = vmax.f32 %v280, %v282
    %v285 = vrot.slane %v280, 2
    %v287 = vmax.f32 %v284, %v285
    %v288 = vrot.slane %v280, 3
    %v290 = vmax.f32 %v287, %v288
    %v291 = vlaneseq
    %v292 = vshrl.u32 %v291, 7
    %v293 = vsub.s32 0, %v292
    %v294 = vrot.slane %v290, %v293
    %v295 = vrcp.pop %v294
    %v296 = vmul.f32 %v280, %v295
    %v297 = vadd.f32 %v237, %v249
    %v298 = vlog2.pop %v290
    %v299 = vmul.f32 %v298, 0.6931472
    %v300 = vadd.f32 %v297, %v299
    %s301 = sadd.s32 %s53, 2
    %s302 = scvt.s32.f32 %s301
    %p303 = scmp.ge.s32.totalorder %s301, 1
    %v304 = vstv %s302
    %vm305 = vcmp.gt.f32.partialorder %v59, %v304
    %s306 = scalar_select %p303, 1, 0
    %v307 = vstv %s306
    %vm308 = vcmp.eq.s32.totalorder %v307, 1
    %vm309 = vmand %vm308, %vm305
    %v310 = vsel %vm309, 1, 0
    %v311 = vlaneseq
    %v312 = vshrl.u32 %v311, 7
    %v313 = vsub.s32 0, %v312
    %v314 = vrot.slane %v310, %v313
    %vm315 = vcmp.eq.s32.totalorder %v314, 1
    %v316 = vsel %vm315, %v296, %v236
    %v317 = vsel %vm309, %v300, %v237
    %s318 = scalar_lea.vmem %s1, 12
    %v319 = vld [vmem:[%s318] sm:$0xf]
    %v321 = vrot.slane %v319, 1
    %v323 = vmax.f32 %v319, %v321
    %v324 = vrot.slane %v319, 2
    %v326 = vmax.f32 %v323, %v324
    %v327 = vrot.slane %v319, 3
    %v329 = vmax.f32 %v326, %v327
    %v330 = vlaneseq
    %v331 = vshrl.u32 %v330, 7
    %v332 = vsub.s32 0, %v331
    %v333 = vrot.slane %v329, %v332
    %v334 = vsub.f32 %v319, %v333
    %v335 = vmul.f32 %v334, 1.442695
    %v336 = vpow.pop %v335
    %v337 = vlaneseq
    %v338 = vshrl.u32 %v337, 7
    %v339 = vsub.s32 0, %v338
    %v340 = vrot.slane %v316, %v339
    %v341 = vmul.f32 %v84, %v340
    %v342 = vlaneseq
    %v343 = vshrl.u32 %v342, 7
    %v344 = vsub.s32 1, %v343
    %v345 = vrot.slane %v316, %v344
    %v346 = vmul.f32 %v93, %v345
    %v347 = vadd.f32 %v341, %v346
    %v348 = vlaneseq
    %v349 = vshrl.u32 %v348, 7
    %v350 = vsub.s32 2, %v349
    %v351 = vrot.slane %v316, %v350
    %v352 = vmul.f32 %v103, %v351
    %v353 = vadd.f32 %v347, %v352
    %v354 = vlaneseq
    %v355 = vshrl.u32 %v354, 7
    %v356 = vsub.s32 3, %v355
    %v357 = vrot.slane %v316, %v356
    %v358 = vmul.f32 %v113, %v357
    %v359 = vadd.f32 %v353, %v358
    %v360 = vmul.f32 %v359, %v336
    %v362 = vrot.slane %v360, 1
    %v364 = vmax.f32 %v360, %v362
    %v365 = vrot.slane %v360, 2
    %v367 = vmax.f32 %v364, %v365
    %v368 = vrot.slane %v360, 3
    %v370 = vmax.f32 %v367, %v368
    %v371 = vlaneseq
    %v372 = vshrl.u32 %v371, 7
    %v373 = vsub.s32 0, %v372
    %v374 = vrot.slane %v370, %v373
    %v375 = vrcp.pop %v374
    %v376 = vmul.f32 %v360, %v375
    %v377 = vadd.f32 %v317, %v329
    %v378 = vlog2.pop %v370
    %v379 = vmul.f32 %v378, 0.6931472
    %v380 = vadd.f32 %v377, %v379
    %s381 = sadd.s32 %s53, 3
    %s382 = scvt.s32.f32 %s381
    %p383 = scmp.ge.s32.totalorder %s381, 1
    %v384 = vstv %s382
    %vm385 = vcmp.gt.f32.partialorder %v59, %v384
    %s386 = scalar_select %p383, 1, 0
    %v387 = vstv %s386
    %vm388 = vcmp.eq.s32.totalorder %v387, 1
    %vm389 = vmand %vm388, %vm385
    %v390 = vsel %vm389, 1, 0
    %v391 = vlaneseq
    %v392 = vshrl.u32 %v391, 7
    %v393 = vsub.s32 0, %v392
    %v394 = vrot.slane %v390, %v393
    %vm395 = vcmp.eq.s32.totalorder %v394, 1
    %v396 = vsel %vm395, %v376, %v316
    %v397 = vsel %vm389, %v380, %v317
    %s398 = scalar_lea.vmem %s1, 16
    %v399 = vld [vmem:[%s398] sm:$0xf]
    %v401 = vrot.slane %v399, 1
    %v403 = vmax.f32 %v399, %v401
    %v404 = vrot.slane %v399, 2
    %v406 = vmax.f32 %v403, %v404
    %v407 = vrot.slane %v399, 3
    %v409 = vmax.f32 %v406, %v407
    %v410 = vlaneseq
    %v411 = vshrl.u32 %v410, 7
    %v412 = vsub.s32 0, %v411
    %v413 = vrot.slane %v409, %v412
    %v414 = vsub.f32 %v399, %v413
    %v415 = vmul.f32 %v414, 1.442695
    %v416 = vpow.pop %v415
    %v417 = vlaneseq
    %v418 = vshrl.u32 %v417, 7
    %v419 = vsub.s32 0, %v418
    %v420 = vrot.slane %v396, %v419
    %v421 = vmul.f32 %v84, %v420
    %v422 = vlaneseq
    %v423 = vshrl.u32 %v422, 7
    %v424 = vsub.s32 1, %v423
    %v425 = vrot.slane %v396, %v424
    %v426 = vmul.f32 %v93, %v425
    %v427 = vadd.f32 %v421, %v426
    %v428 = vlaneseq
    %v429 = vshrl.u32 %v428, 7
    %v430 = vsub.s32 2, %v429
    %v431 = vrot.slane %v396, %v430
    %v432 = vmul.f32 %v103, %v431
    %v433 = vadd.f32 %v427, %v432
    %v434 = vlaneseq
    %v435 = vshrl.u32 %v434, 7
    %v436 = vsub.s32 3, %v435
    %v437 = vrot.slane %v396, %v436
    %v438 = vmul.f32 %v113, %v437
    %v439 = vadd.f32 %v433, %v438
    %v440 = vmul.f32 %v439, %v416
    %v442 = vrot.slane %v440, 1
    %v444 = vmax.f32 %v440, %v442
    %v445 = vrot.slane %v440, 2
    %v447 = vmax.f32 %v444, %v445
    %v448 = vrot.slane %v440, 3
    %v450 = vmax.f32 %v447, %v448
    %v451 = vlaneseq
    %v452 = vshrl.u32 %v451, 7
    %v453 = vsub.s32 0, %v452
    %v454 = vrot.slane %v450, %v453
    %v455 = vrcp.pop %v454
    %v456 = vmul.f32 %v440, %v455
    %v457 = vadd.f32 %v397, %v409
    %v458 = vlog2.pop %v450
    %v459 = vmul.f32 %v458, 0.6931472
    %v460 = vadd.f32 %v457, %v459
    %s461 = sadd.s32 %s53, 4
    %s462 = scvt.s32.f32 %s461
    %p463 = scmp.ge.s32.totalorder %s461, 1
    %v464 = vstv %s462
    %vm465 = vcmp.gt.f32.partialorder %v59, %v464
    %s466 = scalar_select %p463, 1, 0
    %v467 = vstv %s466
    %vm468 = vcmp.eq.s32.totalorder %v467, 1
    %vm469 = vmand %vm468, %vm465
    %v470 = vsel %vm469, 1, 0
    %v471 = vlaneseq
    %v472 = vshrl.u32 %v471, 7
    %v473 = vsub.s32 0, %v472
    %v474 = vrot.slane %v470, %v473
    %vm475 = vcmp.eq.s32.totalorder %v474, 1
    %v476 = vsel %vm475, %v456, %v396
    %v477 = vsel %vm469, %v460, %v397
    %s478 = scalar_lea.vmem %s1, 20
    %v479 = vld [vmem:[%s478] sm:$0xf]
    %v481 = vrot.slane %v479, 1
    %v483 = vmax.f32 %v479, %v481
    %v484 = vrot.slane %v479, 2
    %v486 = vmax.f32 %v483, %v484
    %v487 = vrot.slane %v479, 3
    %v489 = vmax.f32 %v486, %v487
    %v490 = vlaneseq
    %v491 = vshrl.u32 %v490, 7
    %v492 = vsub.s32 0, %v491
    %v493 = vrot.slane %v489, %v492
    %v494 = vsub.f32 %v479, %v493
    %v495 = vmul.f32 %v494, 1.442695
    %v496 = vpow.pop %v495
    %v497 = vlaneseq
    %v498 = vshrl.u32 %v497, 7
    %v499 = vsub.s32 0, %v498
    %v500 = vrot.slane %v476, %v499
    %v501 = vmul.f32 %v84, %v500
    %v502 = vlaneseq
    %v503 = vshrl.u32 %v502, 7
    %v504 = vsub.s32 1, %v503
    %v505 = vrot.slane %v476, %v504
    %v506 = vmul.f32 %v93, %v505
    %v507 = vadd.f32 %v501, %v506
    %v508 = vlaneseq
    %v509 = vshrl.u32 %v508, 7
    %v510 = vsub.s32 2, %v509
    %v511 = vrot.slane %v476, %v510
    %v512 = vmul.f32 %v103, %v511
    %v513 = vadd.f32 %v507, %v512
    %v514 = vlaneseq
    %v515 = vshrl.u32 %v514, 7
    %v516 = vsub.s32 3, %v515
    %v517 = vrot.slane %v476, %v516
    %v518 = vmul.f32 %v113, %v517
    %v519 = vadd.f32 %v513, %v518
    %v520 = vmul.f32 %v519, %v496
    %v522 = vrot.slane %v520, 1
    %v524 = vmax.f32 %v520, %v522
    %v525 = vrot.slane %v520, 2
    %v527 = vmax.f32 %v524, %v525
    %v528 = vrot.slane %v520, 3
    %v530 = vmax.f32 %v527, %v528
    %v531 = vlaneseq
    %v532 = vshrl.u32 %v531, 7
    %v533 = vsub.s32 0, %v532
    %v534 = vrot.slane %v530, %v533
    %v535 = vrcp.pop %v534
    %v536 = vmul.f32 %v520, %v535
    %v537 = vadd.f32 %v477, %v489
    %v538 = vlog2.pop %v530
    %v539 = vmul.f32 %v538, 0.6931472
    %v540 = vadd.f32 %v537, %v539
    %s541 = sadd.s32 %s53, 5
    %s542 = scvt.s32.f32 %s541
    %p543 = scmp.ge.s32.totalorder %s541, 1
    %v544 = vstv %s542
    %vm545 = vcmp.gt.f32.partialorder %v59, %v544
    %s546 = scalar_select %p543, 1, 0
    %v547 = vstv %s546
    %vm548 = vcmp.eq.s32.totalorder %v547, 1
    %vm549 = vmand %vm548, %vm545
    %v550 = vsel %vm549, 1, 0
    %v551 = vlaneseq
    %v552 = vshrl.u32 %v551, 7
    %v553 = vsub.s32 0, %v552
    %v554 = vrot.slane %v550, %v553
    %vm555 = vcmp.eq.s32.totalorder %v554, 1
    %v556 = vsel %vm555, %v536, %v476
    %v557 = vsel %vm549, %v540, %v477
    %s558 = scalar_lea.vmem %s1, 24
    %v559 = vld [vmem:[%s558] sm:$0xf]
    %v561 = vrot.slane %v559, 1
    %v563 = vmax.f32 %v559, %v561
    %v564 = vrot.slane %v559, 2
    %v566 = vmax.f32 %v563, %v564
    %v567 = vrot.slane %v559, 3
    %v569 = vmax.f32 %v566, %v567
    %v570 = vlaneseq
    %v571 = vshrl.u32 %v570, 7
    %v572 = vsub.s32 0, %v571
    %v573 = vrot.slane %v569, %v572
    %v574 = vsub.f32 %v559, %v573
    %v575 = vmul.f32 %v574, 1.442695
    %v576 = vpow.pop %v575
    %v577 = vlaneseq
    %v578 = vshrl.u32 %v577, 7
    %v579 = vsub.s32 0, %v578
    %v580 = vrot.slane %v556, %v579
    %v581 = vmul.f32 %v84, %v580
    %v582 = vlaneseq
    %v583 = vshrl.u32 %v582, 7
    %v584 = vsub.s32 1, %v583
    %v585 = vrot.slane %v556, %v584
    %v586 = vmul.f32 %v93, %v585
    %v587 = vadd.f32 %v581, %v586
    %v588 = vlaneseq
    %v589 = vshrl.u32 %v588, 7
    %v590 = vsub.s32 2, %v589
    %v591 = vrot.slane %v556, %v590
    %v592 = vmul.f32 %v103, %v591
    %v593 = vadd.f32 %v587, %v592
    %v594 = vlaneseq
    %v595 = vshrl.u32 %v594, 7
    %v596 = vsub.s32 3, %v595
    %v597 = vrot.slane %v556, %v596
    %v598 = vmul.f32 %v113, %v597
    %v599 = vadd.f32 %v593, %v598
    %v600 = vmul.f32 %v599, %v576
    %v602 = vrot.slane %v600, 1
    %v604 = vmax.f32 %v600, %v602
    %v605 = vrot.slane %v600, 2
    %v607 = vmax.f32 %v604, %v605
    %v608 = vrot.slane %v600, 3
    %v610 = vmax.f32 %v607, %v608
    %v611 = vlaneseq
    %v612 = vshrl.u32 %v611, 7
    %v613 = vsub.s32 0, %v612
    %v614 = vrot.slane %v610, %v613
    %v615 = vrcp.pop %v614
    %v616 = vmul.f32 %v600, %v615
    %v617 = vadd.f32 %v557, %v569
    %v618 = vlog2.pop %v610
    %v619 = vmul.f32 %v618, 0.6931472
    %v620 = vadd.f32 %v617, %v619
    %s621 = sadd.s32 %s53, 6
    %s622 = scvt.s32.f32 %s621
    %p623 = scmp.ge.s32.totalorder %s621, 1
    %v624 = vstv %s622
    %vm625 = vcmp.gt.f32.partialorder %v59, %v624
    %s626 = scalar_select %p623, 1, 0
    %v627 = vstv %s626
    %vm628 = vcmp.eq.s32.totalorder %v627, 1
    %vm629 = vmand %vm628, %vm625
    %v630 = vsel %vm629, 1, 0
    %v631 = vlaneseq
    %v632 = vshrl.u32 %v631, 7
    %v633 = vsub.s32 0, %v632
    %v634 = vrot.slane %v630, %v633
    %vm635 = vcmp.eq.s32.totalorder %v634, 1
    %v636 = vsel %vm635, %v616, %v556
    %v637 = vsel %vm629, %v620, %v557
    %s638 = scalar_lea.vmem %s1, 28
    %v639 = vld [vmem:[%s638] sm:$0xf]
    %v641 = vrot.slane %v639, 1
    %v643 = vmax.f32 %v639, %v641
    %v644 = vrot.slane %v639, 2
    %v646 = vmax.f32 %v643, %v644
    %v647 = vrot.slane %v639, 3
    %v649 = vmax.f32 %v646, %v647
    %v650 = vlaneseq
    %v651 = vshrl.u32 %v650, 7
    %v652 = vsub.s32 0, %v651
    %v653 = vrot.slane %v649, %v652
    %v654 = vsub.f32 %v639, %v653
    %v655 = vmul.f32 %v654, 1.442695
    %v656 = vpow.pop %v655
    %v657 = vlaneseq
    %v658 = vshrl.u32 %v657, 7
    %v659 = vsub.s32 0, %v658
    %v660 = vrot.slane %v636, %v659
    %v661 = vmul.f32 %v84, %v660
    %v662 = vlaneseq
    %v663 = vshrl.u32 %v662, 7
    %v664 = vsub.s32 1, %v663
    %v665 = vrot.slane %v636, %v664
    %v666 = vmul.f32 %v93, %v665
    %v667 = vadd.f32 %v661, %v666
    %v668 = vlaneseq
    %v669 = vshrl.u32 %v668, 7
    %v670 = vsub.s32 2, %v669
    %v671 = vrot.slane %v636, %v670
    %v672 = vmul.f32 %v103, %v671
    %v673 = vadd.f32 %v667, %v672
    %v674 = vlaneseq
    %v675 = vshrl.u32 %v674, 7
    %v676 = vsub.s32 3, %v675
    %v677 = vrot.slane %v636, %v676
    %v678 = vmul.f32 %v113, %v677
    %v679 = vadd.f32 %v673, %v678
    %v680 = vmul.f32 %v679, %v656
    %v682 = vrot.slane %v680, 1
    %v684 = vmax.f32 %v680, %v682
    %v685 = vrot.slane %v680, 2
    %v687 = vmax.f32 %v684, %v685
    %v688 = vrot.slane %v680, 3
    %v690 = vmax.f32 %v687, %v688
    %v691 = vlaneseq
    %v692 = vshrl.u32 %v691, 7
    %v693 = vsub.s32 0, %v692
    %v694 = vrot.slane %v690, %v693
    %v695 = vrcp.pop %v694
    %v696 = vmul.f32 %v680, %v695
    %v697 = vadd.f32 %v637, %v649
    %v698 = vlog2.pop %v690
    %v699 = vmul.f32 %v698, 0.6931472
    %v700 = vadd.f32 %v697, %v699
    %s701 = sadd.s32 %s53, 7
    %s702 = scvt.s32.f32 %s701
    %p703 = scmp.ge.s32.totalorder %s701, 1
    %v704 = vstv %s702
    %vm705 = vcmp.gt.f32.partialorder %v59, %v704
    %s706 = scalar_select %p703, 1, 0
    %v707 = vstv %s706
    %vm708 = vcmp.eq.s32.totalorder %v707, 1
    %vm709 = vmand %vm708, %vm705
    %v710 = vsel %vm709, 1, 0
    %v711 = vlaneseq
    %v712 = vshrl.u32 %v711, 7
    %v713 = vsub.s32 0, %v712
    %v714 = vrot.slane %v710, %v713
    %vm715 = vcmp.eq.s32.totalorder %v714, 1
    %v716 = vsel %vm715, %v696, %v636
    %v717 = vsel %vm709, %v700, %v637
    %718 = vst [vmem:[#allocation2] sm:$0xf] %v716
    %719 = vst [vmem:[#allocation3] sm:$0x1] %v717
  $region29: #{crf_forward.1} parent=0 // pred_fallthru
    _
  // Predicated region
  $region30: #{crf_forward.1} parent=0 // pred_check
    %p720 = pneg %p22
  $region31: #{crf_forward.1} parent=0 // pred_check_branch
    %722 = sbr.rel (%p720) target = $region33
  $region32: #{crf_forward.1} parent=0 // pred_region
    %v723 = vld [vmem:[#allocation2] sm:$0xf]
    %v724 = vld [vmem:[%s4] sm:$0xf]
    %726 = vset.pattern.permute.xlu0 0
    %727 = vperm.xlu0 %726, %v724
    %v728 = vpop.permute.xlu0 %727
    %v730 = vmul.f32 %v723, %v728
    %v732 = vrot.slane %v730, 1
    %v734 = vadd.f32 %v730, %v732
    %v735 = vrot.slane %v730, 2
    %v737 = vadd.f32 %v734, %v735
    %v738 = vrot.slane %v730, 3
    %v740 = vadd.f32 %v737, %v738
    %v741 = vld [vmem:[#allocation3] sm:$0x1]
    %v742 = vlog2.pop %v740
    %v743 = vmul.f32 %v742, 0.6931472
    %v744 = vadd.f32 %v741, %v743
    %745 = vst [vmem:[%s6] sm:$0x1] %v744
  $region33: #{crf_forward.1} parent=0 // pred_fallthru
    _
  // Predicated region
  $region34: #{crf_forward.1} parent=0 // pred_check
    _
  $region35: #{crf_forward.1} parent=0 // pred_check_branch
    %747 = sbr.rel (0) target = $region37
  $region36: #{crf_forward.1} parent=0 // pred_region
    _
  $region37: #{crf_forward.1} parent=0 // pred_fallthru
    _
  // Predicated region
  $region38: #{crf_forward.1} parent=0 // pred_check
    _
  $region39: #{crf_forward.1} parent=0 // pred_check_branch
    %749 = sbr.rel (0) target = $region41
  $region40: #{crf_forward.1} parent=0 // pred_region
    _
  $region41: #{crf_forward.1} parent=0 // pred_fallthru
    _

</llo_original>
